<compile_context>
chip_gen: v7x
topology: tpu7x:2x2x1
jax: 0.10.0
libtpu: 0.0.40
codegen_flags: <defaults>
</compile_context>

<pallas_src>
import jax
import jax.numpy as jnp
import numpy as np
from jax.experimental import pallas as pl
from jax.experimental.pallas import tpu as pltpu


# ------------------------- Pallas kernel -------------------------

def actor_fused_kernel(x_ref, wc_ref, bc_ref, w1_ref, b1_ref, w2_ref, b2_ref, o_ref):
    # conv as a single dense matmul (Toeplitz-expanded weights) + ReLU
    h = jnp.dot(x_ref[...], wc_ref[...], preferred_element_type=jnp.float32)
    h = jnp.maximum(h + bc_ref[...], 0.0)
    # fc1 + ReLU (columns of the conv output are already in PyTorch flatten order)
    h = jnp.dot(h, w1_ref[...], preferred_element_type=jnp.float32)
    h = jnp.maximum(h + b1_ref[...], 0.0)
    # fc_logits
    o_ref[...] = jnp.dot(h, w2_ref[...], preferred_element_type=jnp.float32) + b2_ref[...]


# ------------------------- wrapper -------------------------

def actor_forward(x_nchw, packed):
    """Jitted hot path: one reshape + one fused pallas_call."""
    wconv, bconv, w1t, b1r, w2t, b2r = packed
    N = x_nchw.shape[0]
    n_actions = w2t.shape[1]

    x_flat = x_nchw.astype(jnp.float32).reshape(N, -1)  # NCHW flatten (free)

    kin, dconv = wconv.shape
    d1 = w1t.shape[1]
    flops = 2 * N * (kin * dconv + dconv * d1 + d1 * n_actions)
    bytes_accessed = 4 * (x_flat.size + wconv.size + bconv.size + w1t.size
                          + b1r.size + w2t.size + b2r.size + N * n_actions)

    vmem = pl.BlockSpec(memory_space=pltpu.MemorySpace.VMEM)
    return pl.pallas_call(
        actor_fused_kernel,
        out_shape=jax.ShapeDtypeStruct((N, n_actions), jnp.float32),
        in_specs=[vmem] * 7,
        out_specs=vmem,
        cost_estimate=pl.CostEstimate(flops=int(flops), transcendentals=0,
                                      bytes_accessed=int(bytes_accessed)),
    )(x_flat, wconv, bconv, w1t, b1r, w2t, b2r)


# ------------------------- params, packing & reference -------------------------

def init_params(key, obs_shape, n_actions):
    """Deterministic kaiming-normal-like init; biases are 0 (bias_const=0.0).
    Stored in PyTorch layouts: conv (Cout,Cin,KH,KW), linear (out,in)."""
    Cin, H, W = obs_shape
    Cout, K = 16, 3
    Ho, Wo = H - K + 1, W - K + 1
    out_dim = Cout * Ho * Wo
    k1, k2, k3 = jax.random.split(key, 3)
    wc = jax.random.normal(k1, (Cout, Cin, K, K), jnp.float32) * np.sqrt(2.0 / (Cin * K * K))
    bc = jnp.zeros((Cout,), jnp.float32)
    w1 = jax.random.normal(k2, (128, out_dim), jnp.float32) * np.sqrt(2.0 / out_dim)
    b1 = jnp.zeros((128,), jnp.float32)
    w2 = jax.random.normal(k3, (n_actions, 128), jnp.float32) * np.sqrt(2.0 / 128.0)
    b2 = jnp.zeros((n_actions,), jnp.float32)
    return (wc, bc, w1, b1, w2, b2)


def pack_params(params, obs_shape):
    """One-time (outside jit, host-side) repack of PyTorch-layout params into
    the matmul layouts the fused kernel consumes.

    The conv weight is expanded into a dense Toeplitz matrix:
      wconv[ci*H*W + (i+ki)*W + (j+kj), c*Ho*Wo + i*Wo + j] = wc[c, ci, ki, kj]
    so rows index the NCHW flatten of x and columns index PyTorch's
    nn.Flatten(NCHW conv output) ordering -> no activation permutes at runtime
    and fc1's weight is used as a plain transpose.  Sized for MinAtar-scale
    boards (10x10 -> ~1.6 MiB), where this easily fits VMEM.
    """
    wc, bc, w1, b1, w2, b2 = params
    Cin, H, W = obs_shape
    wc_np = np.asarray(wc, np.float32)
    Cout, _, KH, KW = wc_np.shape
    Ho, Wo = H - KH + 1, W - KW + 1

    wconv6 = np.zeros((Cin, H, W, Cout, Ho, Wo), np.float32)
    for ki in range(KH):
        for kj in range(KW):
            for i in range(Ho):
                for j in range(Wo):
                    wconv6[:, i + ki, j + kj, :, i, j] = wc_np[:, :, ki, kj].T
    wconv = wconv6.reshape(Cin * H * W, Cout * Ho * Wo)

    bconv = np.repeat(np.asarray(bc, np.float32), Ho * Wo).reshape(1, Cout * Ho * Wo)
    w1t = np.asarray(w1, np.float32).T            # (Cout*Ho*Wo, 128)
    b1r = np.asarray(b1, np.float32).reshape(1, -1)
    w2t = np.asarray(w2, np.float32).T            # (128, n_actions)
    b2r = np.asarray(b2, np.float32).reshape(1, -1)

    return tuple(jnp.asarray(a) for a in (wconv, bconv, w1t, b1r, w2t, b2r))


def reference_forward(x_nchw, params):
    wc, bc, w1, b1, w2, b2 = params
    conv = jax.lax.conv_general_dilated(
        x_nchw.astype(jnp.float32), wc, (1, 1), "VALID",
        dimension_numbers=("NCHW", "OIHW", "NCHW"))
    conv = conv + bc[None, :, None, None]
    h = jax.nn.relu(conv.reshape(x_nchw.shape[0], -1))
    h = jax.nn.relu(h @ w1.T + b1)
    return h @ w2.T + b2


# TODO(synk): get_action's Categorical sampling / log_softmax is host-side
# post-processing and is not part of the forward() kernel implemented here.

if __name__ == "__main__":
    key = jax.random.PRNGKey(0)
    k_x, k_p = jax.random.split(key)

    # MinAtar-like small shapes: batch=2, channels=4, 10x10 board, 6 actions.
    obs_shape = (4, 10, 10)
    n_actions = 6
    batch = 2

    x = jax.random.uniform(k_x, (batch, *obs_shape), jnp.float32)
    params = init_params(k_p, obs_shape, n_actions)
    packed = pack_params(params, obs_shape)   # one-time weight prep, outside jit

    logits = jax.jit(actor_forward)(x, packed)
    logits = jax.block_until_ready(logits)

    ref = reference_forward(x, params)
    assert logits.shape == (batch, n_actions), logits.shape
    np.testing.assert_allclose(np.asarray(logits), np.asarray(ref), rtol=1e-5, atol=1e-5)

    print("KERNEL_OK")
</pallas_src>

<mosaic_0001>
module attributes {stable_mosaic.version = 11 : i64} {
  func.func @actor_fused_kernel(%arg0: memref<2x400xf32, #tpu.memory_space<vmem>>, %arg1: memref<400x1024xf32, #tpu.memory_space<vmem>>, %arg2: memref<1x1024xf32, #tpu.memory_space<vmem>>, %arg3: memref<1024x128xf32, #tpu.memory_space<vmem>>, %arg4: memref<1x128xf32, #tpu.memory_space<vmem>>, %arg5: memref<128x6xf32, #tpu.memory_space<vmem>>, %arg6: memref<1x6xf32, #tpu.memory_space<vmem>>, %arg7: memref<2x6xf32, #tpu.memory_space<vmem>>) attributes {dimension_semantics = [], scalar_prefetch = 0 : i64, scratch_operands = 0 : i64, tpu.core_type = #tpu.core_type<tc>} {
    %c0 = arith.constant 0 : index
    %c0_0 = arith.constant 0 : index
    %0 = vector.load %arg0[%c0, %c0_0] : memref<2x400xf32, #tpu.memory_space<vmem>>, vector<2x400xf32>
    %c0_1 = arith.constant 0 : index
    %c0_2 = arith.constant 0 : index
    %1 = vector.load %arg1[%c0_1, %c0_2] : memref<400x1024xf32, #tpu.memory_space<vmem>>, vector<400x1024xf32>
    %cst = arith.constant dense<0.000000e+00> : vector<2x1024xf32>
    %2 = tpu.matmul %0, %1, %cst {dimension_numbers = #tpu.dot_dimension_numbers<[1], [0], [0], [1], [0, 0, 1, 1], [], []>} : vector<2x400xf32>, vector<400x1024xf32>, vector<2x1024xf32> -> vector<2x1024xf32>
    %c0_3 = arith.constant 0 : index
    %c0_4 = arith.constant 0 : index
    %3 = vector.load %arg2[%c0_3, %c0_4] : memref<1x1024xf32, #tpu.memory_space<vmem>>, vector<1x1024xf32>
    %4 = vector.broadcast %3 : vector<1x1024xf32> to vector<2x1024xf32>
    %5 = arith.addf %2, %4 : vector<2x1024xf32>
    %cst_5 = arith.constant 0.000000e+00 : f32
    %6 = vector.broadcast %cst_5 : f32 to vector<2x1024xf32>
    %7 = arith.maximumf %5, %6 : vector<2x1024xf32>
    %c0_6 = arith.constant 0 : index
    %c0_7 = arith.constant 0 : index
    %8 = vector.load %arg3[%c0_6, %c0_7] : memref<1024x128xf32, #tpu.memory_space<vmem>>, vector<1024x128xf32>
    %cst_8 = arith.constant dense<0.000000e+00> : vector<2x128xf32>
    %9 = tpu.matmul %7, %8, %cst_8 {dimension_numbers = #tpu.dot_dimension_numbers<[1], [0], [0], [1], [0, 0, 1, 1], [], []>} : vector<2x1024xf32>, vector<1024x128xf32>, vector<2x128xf32> -> vector<2x128xf32>
    %c0_9 = arith.constant 0 : index
    %c0_10 = arith.constant 0 : index
    %10 = vector.load %arg4[%c0_9, %c0_10] : memref<1x128xf32, #tpu.memory_space<vmem>>, vector<1x128xf32>
    %11 = vector.broadcast %10 : vector<1x128xf32> to vector<2x128xf32>
    %12 = arith.addf %9, %11 : vector<2x128xf32>
    %cst_11 = arith.constant 0.000000e+00 : f32
    %13 = vector.broadcast %cst_11 : f32 to vector<2x128xf32>
    %14 = arith.maximumf %12, %13 : vector<2x128xf32>
    %c0_12 = arith.constant 0 : index
    %c0_13 = arith.constant 0 : index
    %15 = vector.load %arg5[%c0_12, %c0_13] : memref<128x6xf32, #tpu.memory_space<vmem>>, vector<128x6xf32>
    %cst_14 = arith.constant dense<0.000000e+00> : vector<2x6xf32>
    %16 = tpu.matmul %14, %15, %cst_14 {dimension_numbers = #tpu.dot_dimension_numbers<[1], [0], [0], [1], [0, 0, 1, 1], [], []>} : vector<2x128xf32>, vector<128x6xf32>, vector<2x6xf32> -> vector<2x6xf32>
    %c0_15 = arith.constant 0 : index
    %c0_16 = arith.constant 0 : index
    %17 = vector.load %arg6[%c0_15, %c0_16] : memref<1x6xf32, #tpu.memory_space<vmem>>, vector<1x6xf32>
    %18 = vector.broadcast %17 : vector<1x6xf32> to vector<2x6xf32>
    %19 = arith.addf %16, %18 : vector<2x6xf32>
    %c0_17 = arith.constant 0 : index
    %c0_18 = arith.constant 0 : index
    %20 = vector.load %arg7[%c0_17, %c0_18] : memref<2x6xf32, #tpu.memory_space<vmem>>, vector<2x6xf32>
    tpu.vector_store %arg7[%c0_17, %c0_18], %19 {strides = array<i32>} : memref<2x6xf32, #tpu.memory_space<vmem>>, vector<2x6xf32>,
    return
  }
}

</mosaic_0001>

<llo_original>
// kernel: actor_forward.1
$region0: #{actor_forward.1}
  #allocation0 [shape = 'u32[]', space=smem, size = 0x4, offset = 0x4, fixed_abs, tag = 'smem constant byte address 0x4 - core index']
  #allocation1 [shape = 'u32[144,128]{1,0:T(1,128)}', space=vmem, size = 0x12000, scoped, tag = 'internal scratch']
  %s0 = inlined_call_operand.vmem [shape: f32[2,400], index: 0, kind: input, shape index: {}]
  %s1 = inlined_call_operand.hbm [shape: f32[400,1024], index: 1, kind: input, shape index: {}]
  %s2 = inlined_call_operand.hbm [shape: f32[1,1024], index: 2, kind: input, shape index: {}]
  %s3 = inlined_call_operand.hbm [shape: f32[1024,128], index: 3, kind: input, shape index: {}]
  %s4 = inlined_call_operand.hbm [shape: f32[1,128], index: 4, kind: input, shape index: {}]
  %s5 = inlined_call_operand.vmem [shape: f32[128,6], index: 5, kind: input, shape index: {}]
  %s6 = inlined_call_operand.hbm [shape: f32[1,6], index: 6, kind: input, shape index: {}]
  %s7 = inlined_call_operand.hbm [shape: f32[2,6], index: 7, kind: output, shape index: {}]
  %s8 = sld [smem:[#allocation0]]
  $region58: #{actor_forward.1} parent=0
    _
  %s10 = ssub.s32 1, %s8
  %s11 = scalar_select 0, %s10, %s8
  $region1: #{actor_forward.1} parent=0
    #allocation2 [shape = 'u8[1638400]{0}', space=vmem, size = 0x190000, scoped, tag = 'input window, operand 1, single buffered']
    #allocation3 [shape = 's32[1]{0}', space=sflag, size = 0x4, scoped, tag = 'scoped memory for actor_forward.1']
    #allocation4 [shape = 's32[1]{0}', space=sflag, size = 0x4, scoped, tag = 'scoped memory for actor_forward.1']
    #allocation5 [shape = 'u8[4096]{0}', space=vmem, size = 0x1000, scoped, tag = 'input window, operand 2, single buffered']
    #allocation6 [shape = 's32[1]{0}', space=sflag, size = 0x4, scoped, tag = 'scoped memory for actor_forward.1']
    #allocation7 [shape = 'u8[524288]{0}', space=vmem, size = 0x80000, scoped, tag = 'input window, operand 3, single buffered']
    #allocation8 [shape = 'u8[512]{0}', space=vmem, size = 0x400, scoped, tag = 'input window, operand 4, single buffered']
    #allocation9 [shape = 's32[1]{0}', space=sflag, size = 0x4, scoped, tag = 'scoped memory for actor_forward.1']
    #allocation10 [shape = 'u8[512]{0}', space=vmem, size = 0x400, scoped, tag = 'input window, operand 6, single buffered']
    #allocation11 [shape = 'u8[1024]{0}', space=vmem, size = 0x400, scoped, tag = 'output window, operand 0, single buffered']
    %12 = vsyncpa [#allocation3], 0
    %13 = vsyncpa [#allocation6], 0
    %14 = vsyncpa [#allocation9], 0
    %15 = vsyncpa [#allocation4], 0
    // Predicated region
    $region2: #{actor_forward.1} parent=1 // pred_check
      _
    $region3: #{actor_forward.1} parent=1 // pred_check_branch
      %17 = sbr.rel (0) target = $region5
    $region4: #{actor_forward.1} parent=1 // pred_region
      _
    $region5: #{actor_forward.1} parent=1 // pred_fallthru
      _
    // Predicated region
    $region6: #{actor_forward.1} parent=1 // pred_check
      _
    $region7: #{actor_forward.1} parent=1 // pred_check_branch
      %19 = sbr.rel (0) target = $region9
    $region8: #{actor_forward.1} parent=1 // pred_region
      %s21 = ssub.s32 51200, 51200
      %22 = vsyncadd [#allocation3], %s21
      %s23 = sshll.u32 [#allocation2], 4
      %s24 = int_to_ptr.vmem [resolvable:$true] %s23
      %29 = dma.hbm_to_vmem [thread:$0]  %s1, 51200, %s24, [#allocation3], 1024, 1024, 64
    $region9: #{actor_forward.1} parent=1 // pred_fallthru
      _
    // Predicated region
    $region10: #{actor_forward.1} parent=1 // pred_check
      _
    $region11: #{actor_forward.1} parent=1 // pred_check_branch
      %31 = sbr.rel (0) target = $region13
    $region12: #{actor_forward.1} parent=1 // pred_region
      %s33 = ssub.s32 128, 128
      %34 = vsyncadd [#allocation6], %s33
      %s36 = sshll.u32 [#allocation5], 4
      %s37 = int_to_ptr.vmem [resolvable:$true] %s36
      %39 = dma.hbm_to_vmem [thread:$0]  %s2, 128, %s37, [#allocation6]
    $region13: #{actor_forward.1} parent=1 // pred_fallthru
      _
    // Predicated region
    $region14: #{actor_forward.1} parent=1 // pred_check
      _
    $region15: #{actor_forward.1} parent=1 // pred_check_branch
      %41 = sbr.rel (0) target = $region17
    $region16: #{actor_forward.1} parent=1 // pred_region
      %s43 = ssub.s32 16384, 16384
      %44 = vsyncadd [#allocation6], %s43
      %s45 = sshll.u32 [#allocation7], 4
      %s46 = int_to_ptr.vmem [resolvable:$true] %s45
      %51 = dma.hbm_to_vmem [thread:$0]  %s3, 16384, %s46, [#allocation6], 128, 128, 8
    $region17: #{actor_forward.1} parent=1 // pred_fallthru
      _
    // Predicated region
    $region18: #{actor_forward.1} parent=1 // pred_check
      _
    $region19: #{actor_forward.1} parent=1 // pred_check_branch
      %53 = sbr.rel (0) target = $region21
    $region20: #{actor_forward.1} parent=1 // pred_region
      %s55 = ssub.s32 16, 16
      %56 = vsyncadd [#allocation9], %s55
      %s58 = sshll.u32 [#allocation8], 4
      %s59 = int_to_ptr.vmem [resolvable:$true] %s58
      %61 = dma.hbm_to_vmem [thread:$0]  %s4, 16, %s59, [#allocation9]
    $region21: #{actor_forward.1} parent=1 // pred_fallthru
      _
    // Predicated region
    $region22: #{actor_forward.1} parent=1 // pred_check
      _
    $region23: #{actor_forward.1} parent=1 // pred_check_branch
      %63 = sbr.rel (0) target = $region25
    $region24: #{actor_forward.1} parent=1 // pred_region
      _
    $region25: #{actor_forward.1} parent=1 // pred_fallthru
      _
    // Predicated region
    $region26: #{actor_forward.1} parent=1 // pred_check
      _
    $region27: #{actor_forward.1} parent=1 // pred_check_branch
      %65 = sbr.rel (0) target = $region29
    $region28: #{actor_forward.1} parent=1 // pred_region
      %s67 = ssub.s32 16, 16
      %68 = vsyncadd [#allocation9], %s67
      %s70 = sshll.u32 [#allocation10], 4
      %s71 = int_to_ptr.vmem [resolvable:$true] %s70
      %73 = dma.hbm_to_vmem [thread:$0]  %s6, 16, %s71, [#allocation9]
    $region29: #{actor_forward.1} parent=1 // pred_fallthru
      _
    // Predicated region
    $region30: #{actor_forward.1} parent=1 // pred_check
      _
    $region31: #{actor_forward.1} parent=1 // pred_check_branch
      %75 = sbr.rel (0) target = $region33
    $region32: #{actor_forward.1} parent=1 // pred_region
      %76 = dma.done [#allocation3], 51200
    $region33: #{actor_forward.1} parent=1 // pred_fallthru
      _
    // Predicated region
    $region34: #{actor_forward.1} parent=1 // pred_check
      _
    $region35: #{actor_forward.1} parent=1 // pred_check_branch
      %78 = sbr.rel (0) target = $region37
    $region36: #{actor_forward.1} parent=1 // pred_region
      %79 = dma.done [#allocation6], 128
    $region37: #{actor_forward.1} parent=1 // pred_fallthru
      _
    // Predicated region
    $region38: #{actor_forward.1} parent=1 // pred_check
      _
    $region39: #{actor_forward.1} parent=1 // pred_check_branch
      %81 = sbr.rel (0) target = $region41
    $region40: #{actor_forward.1} parent=1 // pred_region
      %82 = dma.done [#allocation6], 16384
    $region41: #{actor_forward.1} parent=1 // pred_fallthru
      _
    // Predicated region
    $region42: #{actor_forward.1} parent=1 // pred_check
      _
    $region43: #{actor_forward.1} parent=1 // pred_check_branch
      %84 = sbr.rel (0) target = $region45
    $region44: #{actor_forward.1} parent=1 // pred_region
      %85 = dma.done [#allocation9], 16
    $region45: #{actor_forward.1} parent=1 // pred_fallthru
      _
    // Predicated region
    $region46: #{actor_forward.1} parent=1 // pred_check
      _
    $region47: #{actor_forward.1} parent=1 // pred_check_branch
      %87 = sbr.rel (0) target = $region49
    $region48: #{actor_forward.1} parent=1 // pred_region
      %88 = dma.done [#allocation9], 16
    $region49: #{actor_forward.1} parent=1 // pred_fallthru
      _
    %v89 = vld [vmem:[%s0] sm:$0xff]
    %v90 = vld [vmem:[#allocation2] sm:$0xff]
    %v91 = vld [vmem:[#allocation2 + $0x8] sm:$0xff]
    %v92 = vld [vmem:[#allocation2 + $0x10] sm:$0xff]
    %v93 = vld [vmem:[#allocation2 + $0x18] sm:$0xff]
    %v94 = vld [vmem:[#allocation2 + $0x20] sm:$0xff]
    %v95 = vld [vmem:[#allocation2 + $0x28] sm:$0xff]
    %v96 = vld [vmem:[#allocation2 + $0x30] sm:$0xff]
    %v97 = vld [vmem:[#allocation2 + $0x38] sm:$0xff]
    %v98 = vld [vmem:[#allocation2 + $0x40] sm:$0xff]
    %v99 = vld [vmem:[#allocation2 + $0x48] sm:$0xff]
    %v100 = vld [vmem:[#allocation2 + $0x50] sm:$0xff]
    %v101 = vld [vmem:[#allocation2 + $0x58] sm:$0xff]
    %v102 = vld [vmem:[#allocation2 + $0x60] sm:$0xff]
    %v103 = vld [vmem:[#allocation2 + $0x68] sm:$0xff]
    %v104 = vld [vmem:[#allocation2 + $0x70] sm:$0xff]
    %v105 = vld [vmem:[#allocation2 + $0x78] sm:$0xff]
    %v106 = vld [vmem:[#allocation2 + $0x80] sm:$0xff]
    %v107 = vld [vmem:[#allocation2 + $0x88] sm:$0xff]
    %v108 = vld [vmem:[#allocation2 + $0x90] sm:$0xff]
    %v109 = vld [vmem:[#allocation2 + $0x98] sm:$0xff]
    %v110 = vld [vmem:[#allocation2 + $0xa0] sm:$0xff]
    %v111 = vld [vmem:[#allocation2 + $0xa8] sm:$0xff]
    %v112 = vld [vmem:[#allocation2 + $0xb0] sm:$0xff]
    %v113 = vld [vmem:[#allocation2 + $0xb8] sm:$0xff]
    %v114 = vld [vmem:[#allocation2 + $0xc0] sm:$0xff]
    %v115 = vld [vmem:[#allocation2 + $0xc8] sm:$0xff]
    %v116 = vld [vmem:[#allocation2 + $0xd0] sm:$0xff]
    %v117 = vld [vmem:[#allocation2 + $0xd8] sm:$0xff]
    %v118 = vld [vmem:[#allocation2 + $0xe0] sm:$0xff]
    %v119 = vld [vmem:[#allocation2 + $0xe8] sm:$0xff]
    %v120 = vld [vmem:[#allocation2 + $0xf0] sm:$0xff]
    %v121 = vld [vmem:[#allocation2 + $0xf8] sm:$0xff]
    %v122 = vld [vmem:[#allocation2 + $0x100] sm:$0xff]
    %v123 = vld [vmem:[#allocation2 + $0x108] sm:$0xff]
    %v124 = vld [vmem:[#allocation2 + $0x110] sm:$0xff]
    %v125 = vld [vmem:[#allocation2 + $0x118] sm:$0xff]
    %v126 = vld [vmem:[#allocation2 + $0x120] sm:$0xff]
    %v127 = vld [vmem:[#allocation2 + $0x128] sm:$0xff]
    %v128 = vld [vmem:[#allocation2 + $0x130] sm:$0xff]
    %v129 = vld [vmem:[#allocation2 + $0x138] sm:$0xff]
    %v130 = vld [vmem:[#allocation2 + $0x140] sm:$0xff]
    %v131 = vld [vmem:[#allocation2 + $0x148] sm:$0xff]
    %v132 = vld [vmem:[#allocation2 + $0x150] sm:$0xff]
    %v133 = vld [vmem:[#allocation2 + $0x158] sm:$0xff]
    %v134 = vld [vmem:[#allocation2 + $0x160] sm:$0xff]
    %v135 = vld [vmem:[#allocation2 + $0x168] sm:$0xff]
    %v136 = vld [vmem:[#allocation2 + $0x170] sm:$0xff]
    %v137 = vld [vmem:[#allocation2 + $0x178] sm:$0xff]
    %v138 = vld [vmem:[#allocation2 + $0x180] sm:$0xff]
    %v139 = vld [vmem:[#allocation2 + $0x188] sm:$0xff]
    %v140 = vld [vmem:[#allocation2 + $0x190] sm:$0xff]
    %v141 = vld [vmem:[#allocation2 + $0x198] sm:$0xff]
    %v142 = vld [vmem:[#allocation2 + $0x1a0] sm:$0xff]
    %v143 = vld [vmem:[#allocation2 + $0x1a8] sm:$0xff]
    %v144 = vld [vmem:[#allocation2 + $0x1b0] sm:$0xff]
    %v145 = vld [vmem:[#allocation2 + $0x1b8] sm:$0xff]
    %v146 = vld [vmem:[#allocation2 + $0x1c0] sm:$0xff]
    %v147 = vld [vmem:[#allocation2 + $0x1c8] sm:$0xff]
    %v148 = vld [vmem:[#allocation2 + $0x1d0] sm:$0xff]
    %v149 = vld [vmem:[#allocation2 + $0x1d8] sm:$0xff]
    %v150 = vld [vmem:[#allocation2 + $0x1e0] sm:$0xff]
    %v151 = vld [vmem:[#allocation2 + $0x1e8] sm:$0xff]
    %v152 = vld [vmem:[#allocation2 + $0x1f0] sm:$0xff]
    %v153 = vld [vmem:[#allocation2 + $0x1f8] sm:$0xff]
    %v154 = vld [vmem:[#allocation2 + $0x200] sm:$0xff]
    %v155 = vld [vmem:[#allocation2 + $0x208] sm:$0xff]
    %v156 = vld [vmem:[#allocation2 + $0x210] sm:$0xff]
    %v157 = vld [vmem:[#allocation2 + $0x218] sm:$0xff]
    %v158 = vld [vmem:[#allocation2 + $0x220] sm:$0xff]
    %v159 = vld [vmem:[#allocation2 + $0x228] sm:$0xff]
    %v160 = vld [vmem:[#allocation2 + $0x230] sm:$0xff]
    %v161 = vld [vmem:[#allocation2 + $0x238] sm:$0xff]
    %v162 = vld [vmem:[#allocation2 + $0x240] sm:$0xff]
    %v163 = vld [vmem:[#allocation2 + $0x248] sm:$0xff]
    %v164 = vld [vmem:[#allocation2 + $0x250] sm:$0xff]
    %v165 = vld [vmem:[#allocation2 + $0x258] sm:$0xff]
    %v166 = vld [vmem:[#allocation2 + $0x260] sm:$0xff]
    %v167 = vld [vmem:[#allocation2 + $0x268] sm:$0xff]
    %v168 = vld [vmem:[#allocation2 + $0x270] sm:$0xff]
    %v169 = vld [vmem:[#allocation2 + $0x278] sm:$0xff]
    %v170 = vld [vmem:[#allocation2 + $0x280] sm:$0xff]
    %v171 = vld [vmem:[#allocation2 + $0x288] sm:$0xff]
    %v172 = vld [vmem:[#allocation2 + $0x290] sm:$0xff]
    %v173 = vld [vmem:[#allocation2 + $0x298] sm:$0xff]
    %v174 = vld [vmem:[#allocation2 + $0x2a0] sm:$0xff]
    %v175 = vld [vmem:[#allocation2 + $0x2a8] sm:$0xff]
    %v176 = vld [vmem:[#allocation2 + $0x2b0] sm:$0xff]
    %v177 = vld [vmem:[#allocation2 + $0x2b8] sm:$0xff]
    %v178 = vld [vmem:[#allocation2 + $0x2c0] sm:$0xff]
    %v179 = vld [vmem:[#allocation2 + $0x2c8] sm:$0xff]
    %v180 = vld [vmem:[#allocation2 + $0x2d0] sm:$0xff]
    %v181 = vld [vmem:[#allocation2 + $0x2d8] sm:$0xff]
    %v182 = vld [vmem:[#allocation2 + $0x2e0] sm:$0xff]
    %v183 = vld [vmem:[#allocation2 + $0x2e8] sm:$0xff]
    %v184 = vld [vmem:[#allocation2 + $0x2f0] sm:$0xff]
    %v185 = vld [vmem:[#allocation2 + $0x2f8] sm:$0xff]
    %v186 = vld [vmem:[#allocation2 + $0x300] sm:$0xff]
    %v187 = vld [vmem:[#allocation2 + $0x308] sm:$0xff]
    %v188 = vld [vmem:[#allocation2 + $0x310] sm:$0xff]
    %v189 = vld [vmem:[#allocation2 + $0x318] sm:$0xff]
    %v190 = vld [vmem:[#allocation2 + $0x320] sm:$0xff]
    %v191 = vld [vmem:[#allocation2 + $0x328] sm:$0xff]
    %v192 = vld [vmem:[#allocation2 + $0x330] sm:$0xff]
    %v193 = vld [vmem:[#allocation2 + $0x338] sm:$0xff]
    %v194 = vld [vmem:[#allocation2 + $0x340] sm:$0xff]
    %v195 = vld [vmem:[#allocation2 + $0x348] sm:$0xff]
    %v196 = vld [vmem:[#allocation2 + $0x350] sm:$0xff]
    %v197 = vld [vmem:[#allocation2 + $0x358] sm:$0xff]
    %v198 = vld [vmem:[#allocation2 + $0x360] sm:$0xff]
    %v199 = vld [vmem:[#allocation2 + $0x368] sm:$0xff]
    %v200 = vld [vmem:[#allocation2 + $0x370] sm:$0xff]
    %v201 = vld [vmem:[#allocation2 + $0x378] sm:$0xff]
    %v202 = vld [vmem:[#allocation2 + $0x380] sm:$0xff]
    %v203 = vld [vmem:[#allocation2 + $0x388] sm:$0xff]
    %v204 = vld [vmem:[#allocation2 + $0x390] sm:$0xff]
    %v205 = vld [vmem:[#allocation2 + $0x398] sm:$0xff]
    %v206 = vld [vmem:[#allocation2 + $0x3a0] sm:$0xff]
    %v207 = vld [vmem:[#allocation2 + $0x3a8] sm:$0xff]
    %v208 = vld [vmem:[#allocation2 + $0x3b0] sm:$0xff]
    %v209 = vld [vmem:[#allocation2 + $0x3b8] sm:$0xff]
    %v210 = vld [vmem:[#allocation2 + $0x3c0] sm:$0xff]
    %v211 = vld [vmem:[#allocation2 + $0x3c8] sm:$0xff]
    %v212 = vld [vmem:[#allocation2 + $0x3d0] sm:$0xff]
    %v213 = vld [vmem:[#allocation2 + $0x3d8] sm:$0xff]
    %v214 = vld [vmem:[#allocation2 + $0x3e0] sm:$0xff]
    %v215 = vld [vmem:[#allocation2 + $0x3e8] sm:$0xff]
    %v216 = vld [vmem:[#allocation2 + $0x3f0] sm:$0xff]
    %v217 = vld [vmem:[#allocation2 + $0x3f8] sm:$0xff]
    %v218 = vld [vmem:[#allocation2 + $0x400] sm:$0xff]
    %v219 = vld [vmem:[#allocation2 + $0x408] sm:$0xff]
    %v220 = vld [vmem:[#allocation2 + $0x410] sm:$0xff]
    %v221 = vld [vmem:[#allocation2 + $0x418] sm:$0xff]
    %v222 = vld [vmem:[#allocation2 + $0x420] sm:$0xff]
    %v223 = vld [vmem:[#allocation2 + $0x428] sm:$0xff]
    %v224 = vld [vmem:[#allocation2 + $0x430] sm:$0xff]
    %v225 = vld [vmem:[#allocation2 + $0x438] sm:$0xff]
    %v226 = vld [vmem:[#allocation2 + $0x440] sm:$0xff]
    %v227 = vld [vmem:[#allocation2 + $0x448] sm:$0xff]
    %v228 = vld [vmem:[#allocation2 + $0x450] sm:$0xff]
    %v229 = vld [vmem:[#allocation2 + $0x458] sm:$0xff]
    %v230 = vld [vmem:[#allocation2 + $0x460] sm:$0xff]
    %v231 = vld [vmem:[#allocation2 + $0x468] sm:$0xff]
    %v232 = vld [vmem:[#allocation2 + $0x470] sm:$0xff]
    %v233 = vld [vmem:[#allocation2 + $0x478] sm:$0xff]
    %v234 = vld [vmem:[#allocation2 + $0x480] sm:$0xff]
    %v235 = vld [vmem:[#allocation2 + $0x488] sm:$0xff]
    %v236 = vld [vmem:[#allocation2 + $0x490] sm:$0xff]
    %v237 = vld [vmem:[#allocation2 + $0x498] sm:$0xff]
    %v238 = vld [vmem:[#allocation2 + $0x4a0] sm:$0xff]
    %v239 = vld [vmem:[#allocation2 + $0x4a8] sm:$0xff]
    %v240 = vld [vmem:[#allocation2 + $0x4b0] sm:$0xff]
    %v241 = vld [vmem:[#allocation2 + $0x4b8] sm:$0xff]
    %v242 = vld [vmem:[#allocation2 + $0x4c0] sm:$0xff]
    %v243 = vld [vmem:[#allocation2 + $0x4c8] sm:$0xff]
    %v244 = vld [vmem:[#allocation2 + $0x4d0] sm:$0xff]
    %v245 = vld [vmem:[#allocation2 + $0x4d8] sm:$0xff]
    %v246 = vld [vmem:[#allocation2 + $0x4e0] sm:$0xff]
    %v247 = vld [vmem:[#allocation2 + $0x4e8] sm:$0xff]
    %v248 = vld [vmem:[#allocation2 + $0x4f0] sm:$0xff]
    %v249 = vld [vmem:[#allocation2 + $0x4f8] sm:$0xff]
    %v250 = vld [vmem:[#allocation2 + $0x500] sm:$0xff]
    %v251 = vld [vmem:[#allocation2 + $0x508] sm:$0xff]
    %v252 = vld [vmem:[#allocation2 + $0x510] sm:$0xff]
    %v253 = vld [vmem:[#allocation2 + $0x518] sm:$0xff]
    %v254 = vld [vmem:[#allocation2 + $0x520] sm:$0xff]
    %v255 = vld [vmem:[#allocation2 + $0x528] sm:$0xff]
    %v256 = vld [vmem:[#allocation2 + $0x530] sm:$0xff]
    %v257 = vld [vmem:[#allocation2 + $0x538] sm:$0xff]
    %v258 = vld [vmem:[#allocation2 + $0x540] sm:$0xff]
    %v259 = vld [vmem:[#allocation2 + $0x548] sm:$0xff]
    %v260 = vld [vmem:[#allocation2 + $0x550] sm:$0xff]
    %v261 = vld [vmem:[#allocation2 + $0x558] sm:$0xff]
    %v262 = vld [vmem:[#allocation2 + $0x560] sm:$0xff]
    %v263 = vld [vmem:[#allocation2 + $0x568] sm:$0xff]
    %v264 = vld [vmem:[#allocation2 + $0x570] sm:$0xff]
    %v265 = vld [vmem:[#allocation2 + $0x578] sm:$0xff]
    %v266 = vld [vmem:[#allocation2 + $0x580] sm:$0xff]
    %v267 = vld [vmem:[#allocation2 + $0x588] sm:$0xff]
    %v268 = vld [vmem:[#allocation2 + $0x590] sm:$0xff]
    %v269 = vld [vmem:[#allocation2 + $0x598] sm:$0xff]
    %v270 = vld [vmem:[#allocation2 + $0x5a0] sm:$0xff]
    %v271 = vld [vmem:[#allocation2 + $0x5a8] sm:$0xff]
    %v272 = vld [vmem:[#allocation2 + $0x5b0] sm:$0xff]
    %v273 = vld [vmem:[#allocation2 + $0x5b8] sm:$0xff]
    %v274 = vld [vmem:[#allocation2 + $0x5c0] sm:$0xff]
    %v275 = vld [vmem:[#allocation2 + $0x5c8] sm:$0xff]
    %v276 = vld [vmem:[#allocation2 + $0x5d0] sm:$0xff]
    %v277 = vld [vmem:[#allocation2 + $0x5d8] sm:$0xff]
    %v278 = vld [vmem:[#allocation2 + $0x5e0] sm:$0xff]
    %v279 = vld [vmem:[#allocation2 + $0x5e8] sm:$0xff]
    %v280 = vld [vmem:[#allocation2 + $0x5f0] sm:$0xff]
    %v281 = vld [vmem:[#allocation2 + $0x5f8] sm:$0xff]
    %v282 = vld [vmem:[#allocation2 + $0x600] sm:$0xff]
    %v283 = vld [vmem:[#allocation2 + $0x608] sm:$0xff]
    %v284 = vld [vmem:[#allocation2 + $0x610] sm:$0xff]
    %v285 = vld [vmem:[#allocation2 + $0x618] sm:$0xff]
    %v286 = vld [vmem:[#allocation2 + $0x620] sm:$0xff]
    %v287 = vld [vmem:[#allocation2 + $0x628] sm:$0xff]
    %v288 = vld [vmem:[#allocation2 + $0x630] sm:$0xff]
    %v289 = vld [vmem:[#allocation2 + $0x638] sm:$0xff]
    %v290 = vld [vmem:[#allocation2 + $0x640] sm:$0xff]
    %v291 = vld [vmem:[#allocation2 + $0x648] sm:$0xff]
    %v292 = vld [vmem:[#allocation2 + $0x650] sm:$0xff]
    %v293 = vld [vmem:[#allocation2 + $0x658] sm:$0xff]
    %v294 = vld [vmem:[#allocation2 + $0x660] sm:$0xff]
    %v295 = vld [vmem:[#allocation2 + $0x668] sm:$0xff]
    %v296 = vld [vmem:[#allocation2 + $0x670] sm:$0xff]
    %v297 = vld [vmem:[#allocation2 + $0x678] sm:$0xff]
    %v298 = vld [vmem:[#allocation2 + $0x680] sm:$0xff]
    %v299 = vld [vmem:[#allocation2 + $0x688] sm:$0xff]
    %v300 = vld [vmem:[#allocation2 + $0x690] sm:$0xff]
    %v301 = vld [vmem:[#allocation2 + $0x698] sm:$0xff]
    %v302 = vld [vmem:[#allocation2 + $0x6a0] sm:$0xff]
    %v303 = vld [vmem:[#allocation2 + $0x6a8] sm:$0xff]
    %v304 = vld [vmem:[#allocation2 + $0x6b0] sm:$0xff]
    %v305 = vld [vmem:[#allocation2 + $0x6b8] sm:$0xff]
    %v306 = vld [vmem:[#allocation2 + $0x6c0] sm:$0xff]
    %v307 = vld [vmem:[#allocation2 + $0x6c8] sm:$0xff]
    %v308 = vld [vmem:[#allocation2 + $0x6d0] sm:$0xff]
    %v309 = vld [vmem:[#allocation2 + $0x6d8] sm:$0xff]
    %v310 = vld [vmem:[#allocation2 + $0x6e0] sm:$0xff]
    %v311 = vld [vmem:[#allocation2 + $0x6e8] sm:$0xff]
    %v312 = vld [vmem:[#allocation2 + $0x6f0] sm:$0xff]
    %v313 = vld [vmem:[#allocation2 + $0x6f8] sm:$0xff]
    %v314 = vld [vmem:[#allocation2 + $0x700] sm:$0xff]
    %v315 = vld [vmem:[#allocation2 + $0x708] sm:$0xff]
    %v316 = vld [vmem:[#allocation2 + $0x710] sm:$0xff]
    %v317 = vld [vmem:[#allocation2 + $0x718] sm:$0xff]
    %v318 = vld [vmem:[#allocation2 + $0x720] sm:$0xff]
    %v319 = vld [vmem:[#allocation2 + $0x728] sm:$0xff]
    %v320 = vld [vmem:[#allocation2 + $0x730] sm:$0xff]
    %v321 = vld [vmem:[#allocation2 + $0x738] sm:$0xff]
    %v322 = vld [vmem:[#allocation2 + $0x740] sm:$0xff]
    %v323 = vld [vmem:[#allocation2 + $0x748] sm:$0xff]
    %v324 = vld [vmem:[#allocation2 + $0x750] sm:$0xff]
    %v325 = vld [vmem:[#allocation2 + $0x758] sm:$0xff]
    %v326 = vld [vmem:[#allocation2 + $0x760] sm:$0xff]
    %v327 = vld [vmem:[#allocation2 + $0x768] sm:$0xff]
    %v328 = vld [vmem:[#allocation2 + $0x770] sm:$0xff]
    %v329 = vld [vmem:[#allocation2 + $0x778] sm:$0xff]
    %v330 = vld [vmem:[#allocation2 + $0x780] sm:$0xff]
    %v331 = vld [vmem:[#allocation2 + $0x788] sm:$0xff]
    %v332 = vld [vmem:[#allocation2 + $0x790] sm:$0xff]
    %v333 = vld [vmem:[#allocation2 + $0x798] sm:$0xff]
    %v334 = vld [vmem:[#allocation2 + $0x7a0] sm:$0xff]
    %v335 = vld [vmem:[#allocation2 + $0x7a8] sm:$0xff]
    %v336 = vld [vmem:[#allocation2 + $0x7b0] sm:$0xff]
    %v337 = vld [vmem:[#allocation2 + $0x7b8] sm:$0xff]
    %v338 = vld [vmem:[#allocation2 + $0x7c0] sm:$0xff]
    %v339 = vld [vmem:[#allocation2 + $0x7c8] sm:$0xff]
    %v340 = vld [vmem:[#allocation2 + $0x7d0] sm:$0xff]
    %v341 = vld [vmem:[#allocation2 + $0x7d8] sm:$0xff]
    %v342 = vld [vmem:[#allocation2 + $0x7e0] sm:$0xff]
    %v343 = vld [vmem:[#allocation2 + $0x7e8] sm:$0xff]
    %v344 = vld [vmem:[#allocation2 + $0x7f0] sm:$0xff]
    %v345 = vld [vmem:[#allocation2 + $0x7f8] sm:$0xff]
    %v346 = vld [vmem:[#allocation2 + $0x800] sm:$0xff]
    %v347 = vld [vmem:[#allocation2 + $0x808] sm:$0xff]
    %v348 = vld [vmem:[#allocation2 + $0x810] sm:$0xff]
    %v349 = vld [vmem:[#allocation2 + $0x818] sm:$0xff]
    %v350 = vld [vmem:[#allocation2 + $0x820] sm:$0xff]
    %v351 = vld [vmem:[#allocation2 + $0x828] sm:$0xff]
    %v352 = vld [vmem:[#allocation2 + $0x830] sm:$0xff]
    %v353 = vld [vmem:[#allocation2 + $0x838] sm:$0xff]
    %v354 = vld [vmem:[#allocation2 + $0x840] sm:$0xff]
    %v355 = vld [vmem:[#allocation2 + $0x848] sm:$0xff]
    %v356 = vld [vmem:[#allocation2 + $0x850] sm:$0xff]
    %v357 = vld [vmem:[#allocation2 + $0x858] sm:$0xff]
    %v358 = vld [vmem:[#allocation2 + $0x860] sm:$0xff]
    %v359 = vld [vmem:[#allocation2 + $0x868] sm:$0xff]
    %v360 = vld [vmem:[#allocation2 + $0x870] sm:$0xff]
    %v361 = vld [vmem:[#allocation2 + $0x878] sm:$0xff]
    %v362 = vld [vmem:[#allocation2 + $0x880] sm:$0xff]
    %v363 = vld [vmem:[#allocation2 + $0x888] sm:$0xff]
    %v364 = vld [vmem:[#allocation2 + $0x890] sm:$0xff]
    %v365 = vld [vmem:[#allocation2 + $0x898] sm:$0xff]
    %v366 = vld [vmem:[#allocation2 + $0x8a0] sm:$0xff]
    %v367 = vld [vmem:[#allocation2 + $0x8a8] sm:$0xff]
    %v368 = vld [vmem:[#allocation2 + $0x8b0] sm:$0xff]
    %v369 = vld [vmem:[#allocation2 + $0x8b8] sm:$0xff]
    %v370 = vld [vmem:[#allocation2 + $0x8c0] sm:$0xff]
    %v371 = vld [vmem:[#allocation2 + $0x8c8] sm:$0xff]
    %v372 = vld [vmem:[#allocation2 + $0x8d0] sm:$0xff]
    %v373 = vld [vmem:[#allocation2 + $0x8d8] sm:$0xff]
    %v374 = vld [vmem:[#allocation2 + $0x8e0] sm:$0xff]
    %v375 = vld [vmem:[#allocation2 + $0x8e8] sm:$0xff]
    %v376 = vld [vmem:[#allocation2 + $0x8f0] sm:$0xff]
    %v377 = vld [vmem:[#allocation2 + $0x8f8] sm:$0xff]
    %v378 = vld [vmem:[#allocation2 + $0x900] sm:$0xff]
    %v379 = vld [vmem:[#allocation2 + $0x908] sm:$0xff]
    %v380 = vld [vmem:[#allocation2 + $0x910] sm:$0xff]
    %v381 = vld [vmem:[#allocation2 + $0x918] sm:$0xff]
    %v382 = vld [vmem:[#allocation2 + $0x920] sm:$0xff]
    %v383 = vld [vmem:[#allocation2 + $0x928] sm:$0xff]
    %v384 = vld [vmem:[#allocation2 + $0x930] sm:$0xff]
    %v385 = vld [vmem:[#allocation2 + $0x938] sm:$0xff]
    %v386 = vld [vmem:[#allocation2 + $0x940] sm:$0xff]
    %v387 = vld [vmem:[#allocation2 + $0x948] sm:$0xff]
    %v388 = vld [vmem:[#allocation2 + $0x950] sm:$0xff]
    %v389 = vld [vmem:[#allocation2 + $0x958] sm:$0xff]
    %v390 = vld [vmem:[#allocation2 + $0x960] sm:$0xff]
    %v391 = vld [vmem:[#allocation2 + $0x968] sm:$0xff]
    %v392 = vld [vmem:[#allocation2 + $0x970] sm:$0xff]
    %v393 = vld [vmem:[#allocation2 + $0x978] sm:$0xff]
    %v394 = vld [vmem:[#allocation2 + $0x980] sm:$0xff]
    %v395 = vld [vmem:[#allocation2 + $0x988] sm:$0xff]
    %v396 = vld [vmem:[#allocation2 + $0x990] sm:$0xff]
    %v397 = vld [vmem:[#allocation2 + $0x998] sm:$0xff]
    %v398 = vld [vmem:[#allocation2 + $0x9a0] sm:$0xff]
    %v399 = vld [vmem:[#allocation2 + $0x9a8] sm:$0xff]
    %v400 = vld [vmem:[#allocation2 + $0x9b0] sm:$0xff]
    %v401 = vld [vmem:[#allocation2 + $0x9b8] sm:$0xff]
    %v402 = vld [vmem:[#allocation2 + $0x9c0] sm:$0xff]
    %v403 = vld [vmem:[#allocation2 + $0x9c8] sm:$0xff]
    %v404 = vld [vmem:[#allocation2 + $0x9d0] sm:$0xff]
    %v405 = vld [vmem:[#allocation2 + $0x9d8] sm:$0xff]
    %v406 = vld [vmem:[#allocation2 + $0x9e0] sm:$0xff]
    %v407 = vld [vmem:[#allocation2 + $0x9e8] sm:$0xff]
    %v408 = vld [vmem:[#allocation2 + $0x9f0] sm:$0xff]
    %v409 = vld [vmem:[#allocation2 + $0x9f8] sm:$0xff]
    %v410 = vld [vmem:[#allocation2 + $0xa00] sm:$0xff]
    %v411 = vld [vmem:[#allocation2 + $0xa08] sm:$0xff]
    %v412 = vld [vmem:[#allocation2 + $0xa10] sm:$0xff]
    %v413 = vld [vmem:[#allocation2 + $0xa18] sm:$0xff]
    %v414 = vld [vmem:[#allocation2 + $0xa20] sm:$0xff]
    %v415 = vld [vmem:[#allocation2 + $0xa28] sm:$0xff]
    %v416 = vld [vmem:[#allocation2 + $0xa30] sm:$0xff]
    %v417 = vld [vmem:[#allocation2 + $0xa38] sm:$0xff]
    %v418 = vld [vmem:[#allocation2 + $0xa40] sm:$0xff]
    %v419 = vld [vmem:[#allocation2 + $0xa48] sm:$0xff]
    %v420 = vld [vmem:[#allocation2 + $0xa50] sm:$0xff]
    %v421 = vld [vmem:[#allocation2 + $0xa58] sm:$0xff]
    %v422 = vld [vmem:[#allocation2 + $0xa60] sm:$0xff]
    %v423 = vld [vmem:[#allocation2 + $0xa68] sm:$0xff]
    %v424 = vld [vmem:[#allocation2 + $0xa70] sm:$0xff]
    %v425 = vld [vmem:[#allocation2 + $0xa78] sm:$0xff]
    %v426 = vld [vmem:[#allocation2 + $0xa80] sm:$0xff]
    %v427 = vld [vmem:[#allocation2 + $0xa88] sm:$0xff]
    %v428 = vld [vmem:[#allocation2 + $0xa90] sm:$0xff]
    %v429 = vld [vmem:[#allocation2 + $0xa98] sm:$0xff]
    %v430 = vld [vmem:[#allocation2 + $0xaa0] sm:$0xff]
    %v431 = vld [vmem:[#allocation2 + $0xaa8] sm:$0xff]
    %v432 = vld [vmem:[#allocation2 + $0xab0] sm:$0xff]
    %v433 = vld [vmem:[#allocation2 + $0xab8] sm:$0xff]
    %v434 = vld [vmem:[#allocation2 + $0xac0] sm:$0xff]
    %v435 = vld [vmem:[#allocation2 + $0xac8] sm:$0xff]
    %v436 = vld [vmem:[#allocation2 + $0xad0] sm:$0xff]
    %v437 = vld [vmem:[#allocation2 + $0xad8] sm:$0xff]
    %v438 = vld [vmem:[#allocation2 + $0xae0] sm:$0xff]
    %v439 = vld [vmem:[#allocation2 + $0xae8] sm:$0xff]
    %v440 = vld [vmem:[#allocation2 + $0xaf0] sm:$0xff]
    %v441 = vld [vmem:[#allocation2 + $0xaf8] sm:$0xff]
    %v442 = vld [vmem:[#allocation2 + $0xb00] sm:$0xff]
    %v443 = vld [vmem:[#allocation2 + $0xb08] sm:$0xff]
    %v444 = vld [vmem:[#allocation2 + $0xb10] sm:$0xff]
    %v445 = vld [vmem:[#allocation2 + $0xb18] sm:$0xff]
    %v446 = vld [vmem:[#allocation2 + $0xb20] sm:$0xff]
    %v447 = vld [vmem:[#allocation2 + $0xb28] sm:$0xff]
    %v448 = vld [vmem:[#allocation2 + $0xb30] sm:$0xff]
    %v449 = vld [vmem:[#allocation2 + $0xb38] sm:$0xff]
    %v450 = vld [vmem:[#allocation2 + $0xb40] sm:$0xff]
    %v451 = vld [vmem:[#allocation2 + $0xb48] sm:$0xff]
    %v452 = vld [vmem:[#allocation2 + $0xb50] sm:$0xff]
    %v453 = vld [vmem:[#allocation2 + $0xb58] sm:$0xff]
    %v454 = vld [vmem:[#allocation2 + $0xb60] sm:$0xff]
    %v455 = vld [vmem:[#allocation2 + $0xb68] sm:$0xff]
    %v456 = vld [vmem:[#allocation2 + $0xb70] sm:$0xff]
    %v457 = vld [vmem:[#allocation2 + $0xb78] sm:$0xff]
    %v458 = vld [vmem:[#allocation2 + $0xb80] sm:$0xff]
    %v459 = vld [vmem:[#allocation2 + $0xb88] sm:$0xff]
    %v460 = vld [vmem:[#allocation2 + $0xb90] sm:$0xff]
    %v461 = vld [vmem:[#allocation2 + $0xb98] sm:$0xff]
    %v462 = vld [vmem:[#allocation2 + $0xba0] sm:$0xff]
    %v463 = vld [vmem:[#allocation2 + $0xba8] sm:$0xff]
    %v464 = vld [vmem:[#allocation2 + $0xbb0] sm:$0xff]
    %v465 = vld [vmem:[#allocation2 + $0xbb8] sm:$0xff]
    %v466 = vld [vmem:[#allocation2 + $0xbc0] sm:$0xff]
    %v467 = vld [vmem:[#allocation2 + $0xbc8] sm:$0xff]
    %v468 = vld [vmem:[#allocation2 + $0xbd0] sm:$0xff]
    %v469 = vld [vmem:[#allocation2 + $0xbd8] sm:$0xff]
    %v470 = vld [vmem:[#allocation2 + $0xbe0] sm:$0xff]
    %v471 = vld [vmem:[#allocation2 + $0xbe8] sm:$0xff]
    %v472 = vld [vmem:[#allocation2 + $0xbf0] sm:$0xff]
    %v473 = vld [vmem:[#allocation2 + $0xbf8] sm:$0xff]
    %v474 = vld [vmem:[#allocation2 + $0xc00] sm:$0xff]
    %v475 = vld [vmem:[#allocation2 + $0xc08] sm:$0xff]
    %v476 = vld [vmem:[#allocation2 + $0xc10] sm:$0xff]
    %v477 = vld [vmem:[#allocation2 + $0xc18] sm:$0xff]
    %v478 = vld [vmem:[#allocation2 + $0xc20] sm:$0xff]
    %v479 = vld [vmem:[#allocation2 + $0xc28] sm:$0xff]
    %v480 = vld [vmem:[#allocation2 + $0xc30] sm:$0xff]
    %v481 = vld [vmem:[#allocation2 + $0xc38] sm:$0xff]
    %v482 = vld [vmem:[#allocation2 + $0xc40] sm:$0xff]
    %v483 = vld [vmem:[#allocation2 + $0xc48] sm:$0xff]
    %v484 = vld [vmem:[#allocation2 + $0xc50] sm:$0xff]
    %v485 = vld [vmem:[#allocation2 + $0xc58] sm:$0xff]
    %v486 = vld [vmem:[#allocation2 + $0xc60] sm:$0xff]
    %v487 = vld [vmem:[#allocation2 + $0xc68] sm:$0xff]
    %v488 = vld [vmem:[#allocation2 + $0xc70] sm:$0xff]
    %v489 = vld [vmem:[#allocation2 + $0xc78] sm:$0xff]
    %v490 = vld [vmem:[#allocation5] sm:$0xff]
    %v492 = vlaneseq
    %v493 = vshrl.u32 %v492, 7
    %v494 = vsub.s32 0, %v493
    %v495 = vrot.slane %v490, %v494
    %v496 = vlaneseq
    %v497 = vshrl.u32 %v496, 7
    %v498 = vsub.s32 1, %v497
    %v499 = vrot.slane %v490, %v498
    %v500 = vlaneseq
    %v501 = vshrl.u32 %v500, 7
    %v502 = vsub.s32 2, %v501
    %v503 = vrot.slane %v490, %v502
    %v504 = vlaneseq
    %v505 = vshrl.u32 %v504, 7
    %v506 = vsub.s32 3, %v505
    %v507 = vrot.slane %v490, %v506
    %v508 = vlaneseq
    %v509 = vshrl.u32 %v508, 7
    %v510 = vsub.s32 4, %v509
    %v511 = vrot.slane %v490, %v510
    %v512 = vlaneseq
    %v513 = vshrl.u32 %v512, 7
    %v514 = vsub.s32 5, %v513
    %v515 = vrot.slane %v490, %v514
    %v516 = vlaneseq
    %v517 = vshrl.u32 %v516, 7
    %v518 = vsub.s32 6, %v517
    %v519 = vrot.slane %v490, %v518
    %v520 = vlaneseq
    %v521 = vshrl.u32 %v520, 7
    %v522 = vsub.s32 7, %v521
    %v523 = vrot.slane %v490, %v522
    %v533 = vcombine.high %v89, %v89
    %v535 = vunpack.c.l.s4 1983009808
    %v536 = vunpack.c.0.s8 %v535
    %v537 = vlaneseq
    %v538 = vshrl.u32 %v537, 7
    %v539 = vsub.s32 %v536, %v538
    %v540 = vrot.slane %v89, %v539
    %v542 = vunpack.c.l.s4 1983009808
    %v543 = vunpack.c.0.s8 %v542
    %v544 = vlaneseq
    %v545 = vshrl.u32 %v544, 7
    %v546 = vsub.s32 %v543, %v545
    %v547 = vrot.slane %v533, %v546
    %v548 = vcombine.high %v540, %v540
    %v549 = vcombine.high %v547, %v547
    %vm553 = vcmask 130048
    %v554 = vsel %vm553, %v549, 0
    %556 = vmatprep.subr.mxu0 %v91
    %557 = vmatpush1.msra.mxu0 %v90
    %558 = vmatprep.subr.mxu0 %v99
    %559 = vmatpush1.msra.mxu0 %v98
    %560 = vmatprep.subr.mxu0 %v107
    %561 = vmatpush1.msra.mxu0 %v106
    %562 = vmatprep.subr.mxu0 %v115
    %563 = vmatpush1.msra.mxu0 %v114
    %564 = vmatprep.subr.mxu0 %v123
    %565 = vmatpush1.msra.mxu0 %v122
    %566 = vmatprep.subr.mxu0 %v131
    %567 = vmatpush1.msra.mxu0 %v130
    %568 = vmatprep.subr.mxu0 %v139
    %569 = vmatpush1.msra.mxu0 %v138
    %570 = vmatprep.subr.mxu0 %v147
    %571 = vmatpush1.msra.mxu0 %v146
    %572 = vmatprep.subr.mxu0 %v155
    %573 = vmatpush1.msra.mxu0 %v154
    %574 = vmatprep.subr.mxu0 %v163
    %575 = vmatpush1.msra.mxu0 %v162
    %576 = vmatprep.subr.mxu0 %v171
    %577 = vmatpush1.msra.mxu0 %v170
    %578 = vmatprep.subr.mxu0 %v179
    %579 = vmatpush1.msra.mxu0 %v178
    %580 = vmatprep.subr.mxu0 %v187
    %581 = vmatpush1.msra.mxu0 %v186
    %582 = vmatprep.subr.mxu0 %v195
    %583 = vmatpush1.msra.mxu0 %v194
    %584 = vmatprep.subr.mxu0 %v203
    %585 = vmatpush1.msra.mxu0 %v202
    %586 = vmatprep.subr.mxu0 %v211
    %587 = vmatpush1.msra.mxu0 %v210
    %588 = vmatprep.subr.mxu0 %v219
    %589 = vmatpush1.msra.mxu0 %v218
    %590 = vmatprep.subr.mxu0 %v227
    %591 = vmatpush1.msra.mxu0 %v226
    %592 = vmatprep.subr.mxu0 %v235
    %593 = vmatpush1.msra.mxu0 %v234
    %594 = vmatprep.subr.mxu0 %v243
    %595 = vmatpush1.msra.mxu0 %v242
    %596 = vmatprep.subr.mxu0 %v251
    %597 = vmatpush1.msra.mxu0 %v250
    %598 = vmatprep.subr.mxu0 %v259
    %599 = vmatpush1.msra.mxu0 %v258
    %600 = vmatprep.subr.mxu0 %v267
    %601 = vmatpush1.msra.mxu0 %v266
    %602 = vmatprep.subr.mxu0 %v275
    %603 = vmatpush1.msra.mxu0 %v274
    %604 = vmatprep.subr.mxu0 %v283
    %605 = vmatpush1.msra.mxu0 %v282
    %606 = vmatprep.subr.mxu0 %v291
    %607 = vmatpush1.msra.mxu0 %v290
    %608 = vmatprep.subr.mxu0 %v299
    %609 = vmatpush1.msra.mxu0 %v298
    %610 = vmatprep.subr.mxu0 %v307
    %611 = vmatpush1.msra.mxu0 %v306
    %612 = vmatprep.subr.mxu0 %v315
    %613 = vmatpush1.msra.mxu0 %v314
    %614 = vmatprep.subr.mxu0 %v323
    %615 = vmatpush1.msra.mxu0 %v322
    %616 = vmatprep.subr.mxu0 %v331
    %617 = vmatpush1.msra.mxu0 %v330
    %618 = vmatprep.subr.mxu0 %v339
    %619 = vmatpush1.msra.mxu0 %v338
    %620 = vmatprep.mubr.f32.mxu0 %v548
    %621 = vmatmul.mubr.f32.gmra.mrb[0].mxu0 %v540
    %v622 = vpop.f32.mrb[0].mxu0
    %v623 = vadd.f32 %v495, %v622
    %v624 = vpop.f32.mrb[0].mxu0
    %v625 = vadd.f32 %v499, %v624
    %626 = vdwg.mxu0
    %627 = vmatprep.subr.mxu0 %v347
    %628 = vmatpush1.msra.mxu0 %v346
    %629 = vmatprep.subr.mxu0 %v355
    %630 = vmatpush1.msra.mxu0 %v354
    %631 = vmatprep.subr.mxu0 %v363
    %632 = vmatpush1.msra.mxu0 %v362
    %633 = vmatprep.subr.mxu0 %v371
    %634 = vmatpush1.msra.mxu0 %v370
    %635 = vmatprep.subr.mxu0 %v379
    %636 = vmatpush1.msra.mxu0 %v378
    %637 = vmatprep.subr.mxu0 %v387
    %638 = vmatpush1.msra.mxu0 %v386
    %639 = vmatprep.subr.mxu0 %v395
    %640 = vmatpush1.msra.mxu0 %v394
    %641 = vmatprep.subr.mxu0 %v403
    %642 = vmatpush1.msra.mxu0 %v402
    %643 = vmatprep.subr.mxu0 %v411
    %644 = vmatpush1.msra.mxu0 %v410
    %645 = vmatprep.subr.mxu0 %v419
    %646 = vmatpush1.msra.mxu0 %v418
    %647 = vmatprep.subr.mxu0 %v427
    %648 = vmatpush1.msra.mxu0 %v426
    %649 = vmatprep.subr.mxu0 %v435
    %650 = vmatpush1.msra.mxu0 %v434
    %651 = vmatprep.subr.mxu0 %v443
    %652 = vmatpush1.msra.mxu0 %v442
    %653 = vmatprep.subr.mxu0 %v451
    %654 = vmatpush1.msra.mxu0 %v450
    %655 = vmatprep.subr.mxu0 %v459
    %656 = vmatpush1.msra.mxu0 %v458
    %657 = vmatprep.subr.mxu0 %v467
    %658 = vmatpush1.msra.mxu0 %v466
    %659 = vmatprep.subr.mxu0 %v475
    %660 = vmatpush1.msra.mxu0 %v474
    %661 = vmatprep.subr.mxu0 %v483
    %662 = vmatpush1.msra.mxu0 %v482
    %663 = vmatprep.subr.mxu0 0.0
    %664 = vmatpush1.msra.mxu0 0.0
    %665 = vmatprep.subr.mxu0 0.0
    %666 = vmatpush1.msra.mxu0 0.0
    %667 = vmatprep.subr.mxu0 0.0
    %668 = vmatpush1.msra.mxu0 0.0
    %669 = vmatprep.subr.mxu0 0.0
    %670 = vmatpush1.msra.mxu0 0.0
    %671 = vmatprep.subr.mxu0 0.0
    %672 = vmatpush1.msra.mxu0 0.0
    %673 = vmatprep.subr.mxu0 0.0
    %674 = vmatpush1.msra.mxu0 0.0
    %675 = vmatprep.subr.mxu0 0.0
    %676 = vmatpush1.msra.mxu0 0.0
    %677 = vmatprep.subr.mxu0 0.0
    %678 = vmatpush1.msra.mxu0 0.0
    %679 = vmatprep.subr.mxu0 0.0
    %680 = vmatpush1.msra.mxu0 0.0
    %681 = vmatprep.subr.mxu0 0.0
    %682 = vmatpush1.msra.mxu0 0.0
    %683 = vmatprep.subr.mxu0 0.0
    %684 = vmatpush1.msra.mxu0 0.0
    %685 = vmatprep.subr.mxu0 0.0
    %686 = vmatpush1.msra.mxu0 0.0
    %687 = vmatprep.subr.mxu0 0.0
    %688 = vmatpush1.msra.mxu0 0.0
    %689 = vmatprep.subr.mxu0 0.0
    %690 = vmatpush1.msra.mxu0 0.0
    %691 = vmatprep.mubr.f32.mxu0 %v554
    %692 = vmatmul.mubr.f32.gmra.mrb[0].mxu0 %v547
    %v693 = vpop.f32.mrb[0].mxu0
    %v694 = vadd.f32 %v623, %v693
    %v695 = vpop.f32.mrb[0].mxu0
    %v696 = vadd.f32 %v625, %v695
    %697 = vdwg.mxu0
    %698 = vmatprep.subr.mxu0 %v93
    %699 = vmatpush1.msra.mxu0 %v92
    %700 = vmatprep.subr.mxu0 %v101
    %701 = vmatpush1.msra.mxu0 %v100
    %702 = vmatprep.subr.mxu0 %v109
    %703 = vmatpush1.msra.mxu0 %v108
    %704 = vmatprep.subr.mxu0 %v117
    %705 = vmatpush1.msra.mxu0 %v116
    %706 = vmatprep.subr.mxu0 %v125
    %707 = vmatpush1.msra.mxu0 %v124
    %708 = vmatprep.subr.mxu0 %v133
    %709 = vmatpush1.msra.mxu0 %v132
    %710 = vmatprep.subr.mxu0 %v141
    %711 = vmatpush1.msra.mxu0 %v140
    %712 = vmatprep.subr.mxu0 %v149
    %713 = vmatpush1.msra.mxu0 %v148
    %714 = vmatprep.subr.mxu0 %v157
    %715 = vmatpush1.msra.mxu0 %v156
    %716 = vmatprep.subr.mxu0 %v165
    %717 = vmatpush1.msra.mxu0 %v164
    %718 = vmatprep.subr.mxu0 %v173
    %719 = vmatpush1.msra.mxu0 %v172
    %720 = vmatprep.subr.mxu0 %v181
    %721 = vmatpush1.msra.mxu0 %v180
    %722 = vmatprep.subr.mxu0 %v189
    %723 = vmatpush1.msra.mxu0 %v188
    %724 = vmatprep.subr.mxu0 %v197
    %725 = vmatpush1.msra.mxu0 %v196
    %726 = vmatprep.subr.mxu0 %v205
    %727 = vmatpush1.msra.mxu0 %v204
    %728 = vmatprep.subr.mxu0 %v213
    %729 = vmatpush1.msra.mxu0 %v212
    %730 = vmatprep.subr.mxu0 %v221
    %731 = vmatpush1.msra.mxu0 %v220
    %732 = vmatprep.subr.mxu0 %v229
    %733 = vmatpush1.msra.mxu0 %v228
    %734 = vmatprep.subr.mxu0 %v237
    %735 = vmatpush1.msra.mxu0 %v236
    %736 = vmatprep.subr.mxu0 %v245
    %737 = vmatpush1.msra.mxu0 %v244
    %738 = vmatprep.subr.mxu0 %v253
    %739 = vmatpush1.msra.mxu0 %v252
    %740 = vmatprep.subr.mxu0 %v261
    %741 = vmatpush1.msra.mxu0 %v260
    %742 = vmatprep.subr.mxu0 %v269
    %743 = vmatpush1.msra.mxu0 %v268
    %744 = vmatprep.subr.mxu0 %v277
    %745 = vmatpush1.msra.mxu0 %v276
    %746 = vmatprep.subr.mxu0 %v285
    %747 = vmatpush1.msra.mxu0 %v284
    %748 = vmatprep.subr.mxu0 %v293
    %749 = vmatpush1.msra.mxu0 %v292
    %750 = vmatprep.subr.mxu0 %v301
    %751 = vmatpush1.msra.mxu0 %v300
    %752 = vmatprep.subr.mxu0 %v309
    %753 = vmatpush1.msra.mxu0 %v308
    %754 = vmatprep.subr.mxu0 %v317
    %755 = vmatpush1.msra.mxu0 %v316
    %756 = vmatprep.subr.mxu0 %v325
    %757 = vmatpush1.msra.mxu0 %v324
    %758 = vmatprep.subr.mxu0 %v333
    %759 = vmatpush1.msra.mxu0 %v332
    %760 = vmatprep.subr.mxu0 %v341
    %761 = vmatpush1.msra.mxu0 %v340
    %762 = vmatprep.mubr.f32.mxu0 %v548
    %763 = vmatmul.mubr.f32.gmra.mrb[0].mxu0 %v540
    %v764 = vpop.f32.mrb[0].mxu0
    %v765 = vadd.f32 %v503, %v764
    %v766 = vpop.f32.mrb[0].mxu0
    %v767 = vadd.f32 %v507, %v766
    %768 = vdwg.mxu0
    %769 = vmatprep.subr.mxu0 %v349
    %770 = vmatpush1.msra.mxu0 %v348
    %771 = vmatprep.subr.mxu0 %v357
    %772 = vmatpush1.msra.mxu0 %v356
    %773 = vmatprep.subr.mxu0 %v365
    %774 = vmatpush1.msra.mxu0 %v364
    %775 = vmatprep.subr.mxu0 %v373
    %776 = vmatpush1.msra.mxu0 %v372
    %777 = vmatprep.subr.mxu0 %v381
    %778 = vmatpush1.msra.mxu0 %v380
    %779 = vmatprep.subr.mxu0 %v389
    %780 = vmatpush1.msra.mxu0 %v388
    %781 = vmatprep.subr.mxu0 %v397
    %782 = vmatpush1.msra.mxu0 %v396
    %783 = vmatprep.subr.mxu0 %v405
    %784 = vmatpush1.msra.mxu0 %v404
    %785 = vmatprep.subr.mxu0 %v413
    %786 = vmatpush1.msra.mxu0 %v412
    %787 = vmatprep.subr.mxu0 %v421
    %788 = vmatpush1.msra.mxu0 %v420
    %789 = vmatprep.subr.mxu0 %v429
    %790 = vmatpush1.msra.mxu0 %v428
    %791 = vmatprep.subr.mxu0 %v437
    %792 = vmatpush1.msra.mxu0 %v436
    %793 = vmatprep.subr.mxu0 %v445
    %794 = vmatpush1.msra.mxu0 %v444
    %795 = vmatprep.subr.mxu0 %v453
    %796 = vmatpush1.msra.mxu0 %v452
    %797 = vmatprep.subr.mxu0 %v461
    %798 = vmatpush1.msra.mxu0 %v460
    %799 = vmatprep.subr.mxu0 %v469
    %800 = vmatpush1.msra.mxu0 %v468
    %801 = vmatprep.subr.mxu0 %v477
    %802 = vmatpush1.msra.mxu0 %v476
    %803 = vmatprep.subr.mxu0 %v485
    %804 = vmatpush1.msra.mxu0 %v484
    %805 = vmatprep.subr.mxu0 0.0
    %806 = vmatpush1.msra.mxu0 0.0
    %807 = vmatprep.subr.mxu0 0.0
    %808 = vmatpush1.msra.mxu0 0.0
    %809 = vmatprep.subr.mxu0 0.0
    %810 = vmatpush1.msra.mxu0 0.0
    %811 = vmatprep.subr.mxu0 0.0
    %812 = vmatpush1.msra.mxu0 0.0
    %813 = vmatprep.subr.mxu0 0.0
    %814 = vmatpush1.msra.mxu0 0.0
    %815 = vmatprep.subr.mxu0 0.0
    %816 = vmatpush1.msra.mxu0 0.0
    %817 = vmatprep.subr.mxu0 0.0
    %818 = vmatpush1.msra.mxu0 0.0
    %819 = vmatprep.subr.mxu0 0.0
    %820 = vmatpush1.msra.mxu0 0.0
    %821 = vmatprep.subr.mxu0 0.0
    %822 = vmatpush1.msra.mxu0 0.0
    %823 = vmatprep.subr.mxu0 0.0
    %824 = vmatpush1.msra.mxu0 0.0
    %825 = vmatprep.subr.mxu0 0.0
    %826 = vmatpush1.msra.mxu0 0.0
    %827 = vmatprep.subr.mxu0 0.0
    %828 = vmatpush1.msra.mxu0 0.0
    %829 = vmatprep.subr.mxu0 0.0
    %830 = vmatpush1.msra.mxu0 0.0
    %831 = vmatprep.subr.mxu0 0.0
    %832 = vmatpush1.msra.mxu0 0.0
    %833 = vmatprep.mubr.f32.mxu0 %v554
    %834 = vmatmul.mubr.f32.gmra.mrb[0].mxu0 %v547
    %v835 = vpop.f32.mrb[0].mxu0
    %v836 = vadd.f32 %v765, %v835
    %v837 = vpop.f32.mrb[0].mxu0
    %v838 = vadd.f32 %v767, %v837
    %839 = vdwg.mxu0
    %840 = vmatprep.subr.mxu0 %v95
    %841 = vmatpush1.msra.mxu0 %v94
    %842 = vmatprep.subr.mxu0 %v103
    %843 = vmatpush1.msra.mxu0 %v102
    %844 = vmatprep.subr.mxu0 %v111
    %845 = vmatpush1.msra.mxu0 %v110
    %846 = vmatprep.subr.mxu0 %v119
    %847 = vmatpush1.msra.mxu0 %v118
    %848 = vmatprep.subr.mxu0 %v127
    %849 = vmatpush1.msra.mxu0 %v126
    %850 = vmatprep.subr.mxu0 %v135
    %851 = vmatpush1.msra.mxu0 %v134
    %852 = vmatprep.subr.mxu0 %v143
    %853 = vmatpush1.msra.mxu0 %v142
    %854 = vmatprep.subr.mxu0 %v151
    %855 = vmatpush1.msra.mxu0 %v150
    %856 = vmatprep.subr.mxu0 %v159
    %857 = vmatpush1.msra.mxu0 %v158
    %858 = vmatprep.subr.mxu0 %v167
    %859 = vmatpush1.msra.mxu0 %v166
    %860 = vmatprep.subr.mxu0 %v175
    %861 = vmatpush1.msra.mxu0 %v174
    %862 = vmatprep.subr.mxu0 %v183
    %863 = vmatpush1.msra.mxu0 %v182
    %864 = vmatprep.subr.mxu0 %v191
    %865 = vmatpush1.msra.mxu0 %v190
    %866 = vmatprep.subr.mxu0 %v199
    %867 = vmatpush1.msra.mxu0 %v198
    %868 = vmatprep.subr.mxu0 %v207
    %869 = vmatpush1.msra.mxu0 %v206
    %870 = vmatprep.subr.mxu0 %v215
    %871 = vmatpush1.msra.mxu0 %v214
    %872 = vmatprep.subr.mxu0 %v223
    %873 = vmatpush1.msra.mxu0 %v222
    %874 = vmatprep.subr.mxu0 %v231
    %875 = vmatpush1.msra.mxu0 %v230
    %876 = vmatprep.subr.mxu0 %v239
    %877 = vmatpush1.msra.mxu0 %v238
    %878 = vmatprep.subr.mxu0 %v247
    %879 = vmatpush1.msra.mxu0 %v246
    %880 = vmatprep.subr.mxu0 %v255
    %881 = vmatpush1.msra.mxu0 %v254
    %882 = vmatprep.subr.mxu0 %v263
    %883 = vmatpush1.msra.mxu0 %v262
    %884 = vmatprep.subr.mxu0 %v271
    %885 = vmatpush1.msra.mxu0 %v270
    %886 = vmatprep.subr.mxu0 %v279
    %887 = vmatpush1.msra.mxu0 %v278
    %888 = vmatprep.subr.mxu0 %v287
    %889 = vmatpush1.msra.mxu0 %v286
    %890 = vmatprep.subr.mxu0 %v295
    %891 = vmatpush1.msra.mxu0 %v294
    %892 = vmatprep.subr.mxu0 %v303
    %893 = vmatpush1.msra.mxu0 %v302
    %894 = vmatprep.subr.mxu0 %v311
    %895 = vmatpush1.msra.mxu0 %v310
    %896 = vmatprep.subr.mxu0 %v319
    %897 = vmatpush1.msra.mxu0 %v318
    %898 = vmatprep.subr.mxu0 %v327
    %899 = vmatpush1.msra.mxu0 %v326
    %900 = vmatprep.subr.mxu0 %v335
    %901 = vmatpush1.msra.mxu0 %v334
    %902 = vmatprep.subr.mxu0 %v343
    %903 = vmatpush1.msra.mxu0 %v342
    %904 = vmatprep.mubr.f32.mxu0 %v548
    %905 = vmatmul.mubr.f32.gmra.mrb[0].mxu0 %v540
    %v906 = vpop.f32.mrb[0].mxu0
    %v907 = vadd.f32 %v511, %v906
    %v908 = vpop.f32.mrb[0].mxu0
    %v909 = vadd.f32 %v515, %v908
    %910 = vdwg.mxu0
    %911 = vmatprep.subr.mxu0 %v351
    %912 = vmatpush1.msra.mxu0 %v350
    %913 = vmatprep.subr.mxu0 %v359
    %914 = vmatpush1.msra.mxu0 %v358
    %915 = vmatprep.subr.mxu0 %v367
    %916 = vmatpush1.msra.mxu0 %v366
    %917 = vmatprep.subr.mxu0 %v375
    %918 = vmatpush1.msra.mxu0 %v374
    %919 = vmatprep.subr.mxu0 %v383
    %920 = vmatpush1.msra.mxu0 %v382
    %921 = vmatprep.subr.mxu0 %v391
    %922 = vmatpush1.msra.mxu0 %v390
    %923 = vmatprep.subr.mxu0 %v399
    %924 = vmatpush1.msra.mxu0 %v398
    %925 = vmatprep.subr.mxu0 %v407
    %926 = vmatpush1.msra.mxu0 %v406
    %927 = vmatprep.subr.mxu0 %v415
    %928 = vmatpush1.msra.mxu0 %v414
    %929 = vmatprep.subr.mxu0 %v423
    %930 = vmatpush1.msra.mxu0 %v422
    %931 = vmatprep.subr.mxu0 %v431
    %932 = vmatpush1.msra.mxu0 %v430
    %933 = vmatprep.subr.mxu0 %v439
    %934 = vmatpush1.msra.mxu0 %v438
    %935 = vmatprep.subr.mxu0 %v447
    %936 = vmatpush1.msra.mxu0 %v446
    %937 = vmatprep.subr.mxu0 %v455
    %938 = vmatpush1.msra.mxu0 %v454
    %939 = vmatprep.subr.mxu0 %v463
    %940 = vmatpush1.msra.mxu0 %v462
    %941 = vmatprep.subr.mxu0 %v471
    %942 = vmatpush1.msra.mxu0 %v470
    %943 = vmatprep.subr.mxu0 %v479
    %944 = vmatpush1.msra.mxu0 %v478
    %945 = vmatprep.subr.mxu0 %v487
    %946 = vmatpush1.msra.mxu0 %v486
    %947 = vmatprep.subr.mxu0 0.0
    %948 = vmatpush1.msra.mxu0 0.0
    %949 = vmatprep.subr.mxu0 0.0
    %950 = vmatpush1.msra.mxu0 0.0
    %951 = vmatprep.subr.mxu0 0.0
    %952 = vmatpush1.msra.mxu0 0.0
    %953 = vmatprep.subr.mxu0 0.0
    %954 = vmatpush1.msra.mxu0 0.0
    %955 = vmatprep.subr.mxu0 0.0
    %956 = vmatpush1.msra.mxu0 0.0
    %957 = vmatprep.subr.mxu0 0.0
    %958 = vmatpush1.msra.mxu0 0.0
    %959 = vmatprep.subr.mxu0 0.0
    %960 = vmatpush1.msra.mxu0 0.0
    %961 = vmatprep.subr.mxu0 0.0
    %962 = vmatpush1.msra.mxu0 0.0
    %963 = vmatprep.subr.mxu0 0.0
    %964 = vmatpush1.msra.mxu0 0.0
    %965 = vmatprep.subr.mxu0 0.0
    %966 = vmatpush1.msra.mxu0 0.0
    %967 = vmatprep.subr.mxu0 0.0
    %968 = vmatpush1.msra.mxu0 0.0
    %969 = vmatprep.subr.mxu0 0.0
    %970 = vmatpush1.msra.mxu0 0.0
    %971 = vmatprep.subr.mxu0 0.0
    %972 = vmatpush1.msra.mxu0 0.0
    %973 = vmatprep.subr.mxu0 0.0
    %974 = vmatpush1.msra.mxu0 0.0
    %975 = vmatprep.mubr.f32.mxu0 %v554
    %976 = vmatmul.mubr.f32.gmra.mrb[0].mxu0 %v547
    %v977 = vpop.f32.mrb[0].mxu0
    %v978 = vadd.f32 %v907, %v977
    %v979 = vpop.f32.mrb[0].mxu0
    %v980 = vadd.f32 %v909, %v979
    %981 = vdwg.mxu0
    %982 = vmatprep.subr.mxu0 %v97
    %983 = vmatpush1.msra.mxu0 %v96
    %984 = vmatprep.subr.mxu0 %v105
    %985 = vmatpush1.msra.mxu0 %v104
    %986 = vmatprep.subr.mxu0 %v113
    %987 = vmatpush1.msra.mxu0 %v112
    %988 = vmatprep.subr.mxu0 %v121
    %989 = vmatpush1.msra.mxu0 %v120
    %990 = vmatprep.subr.mxu0 %v129
    %991 = vmatpush1.msra.mxu0 %v128
    %992 = vmatprep.subr.mxu0 %v137
    %993 = vmatpush1.msra.mxu0 %v136
    %994 = vmatprep.subr.mxu0 %v145
    %995 = vmatpush1.msra.mxu0 %v144
    %996 = vmatprep.subr.mxu0 %v153
    %997 = vmatpush1.msra.mxu0 %v152
    %998 = vmatprep.subr.mxu0 %v161
    %999 = vmatpush1.msra.mxu0 %v160
    %1000 = vmatprep.subr.mxu0 %v169
    %1001 = vmatpush1.msra.mxu0 %v168
    %1002 = vmatprep.subr.mxu0 %v177
    %1003 = vmatpush1.msra.mxu0 %v176
    %1004 = vmatprep.subr.mxu0 %v185
    %1005 = vmatpush1.msra.mxu0 %v184
    %1006 = vmatprep.subr.mxu0 %v193
    %1007 = vmatpush1.msra.mxu0 %v192
    %1008 = vmatprep.subr.mxu0 %v201
    %1009 = vmatpush1.msra.mxu0 %v200
    %1010 = vmatprep.subr.mxu0 %v209
    %1011 = vmatpush1.msra.mxu0 %v208
    %1012 = vmatprep.subr.mxu0 %v217
    %1013 = vmatpush1.msra.mxu0 %v216
    %1014 = vmatprep.subr.mxu0 %v225
    %1015 = vmatpush1.msra.mxu0 %v224
    %1016 = vmatprep.subr.mxu0 %v233
    %1017 = vmatpush1.msra.mxu0 %v232
    %1018 = vmatprep.subr.mxu0 %v241
    %1019 = vmatpush1.msra.mxu0 %v240
    %1020 = vmatprep.subr.mxu0 %v249
    %1021 = vmatpush1.msra.mxu0 %v248
    %1022 = vmatprep.subr.mxu0 %v257
    %1023 = vmatpush1.msra.mxu0 %v256
    %1024 = vmatprep.subr.mxu0 %v265
    %1025 = vmatpush1.msra.mxu0 %v264
    %1026 = vmatprep.subr.mxu0 %v273
    %1027 = vmatpush1.msra.mxu0 %v272
    %1028 = vmatprep.subr.mxu0 %v281
    %1029 = vmatpush1.msra.mxu0 %v280
    %1030 = vmatprep.subr.mxu0 %v289
    %1031 = vmatpush1.msra.mxu0 %v288
    %1032 = vmatprep.subr.mxu0 %v297
    %1033 = vmatpush1.msra.mxu0 %v296
    %1034 = vmatprep.subr.mxu0 %v305
    %1035 = vmatpush1.msra.mxu0 %v304
    %1036 = vmatprep.subr.mxu0 %v313
    %1037 = vmatpush1.msra.mxu0 %v312
    %1038 = vmatprep.subr.mxu0 %v321
    %1039 = vmatpush1.msra.mxu0 %v320
    %1040 = vmatprep.subr.mxu0 %v329
    %1041 = vmatpush1.msra.mxu0 %v328
    %1042 = vmatprep.subr.mxu0 %v337
    %1043 = vmatpush1.msra.mxu0 %v336
    %1044 = vmatprep.subr.mxu0 %v345
    %1045 = vmatpush1.msra.mxu0 %v344
    %1046 = vmatprep.mubr.f32.mxu0 %v548
    %1047 = vmatmul.mubr.f32.gmra.mrb[0].mxu0 %v540
    %v1048 = vpop.f32.mrb[0].mxu0
    %v1049 = vadd.f32 %v519, %v1048
    %v1050 = vpop.f32.mrb[0].mxu0
    %v1051 = vadd.f32 %v523, %v1050
    %1052 = vdwg.mxu0
    %1053 = vmatprep.subr.mxu0 %v353
    %1054 = vmatpush1.msra.mxu0 %v352
    %1055 = vmatprep.subr.mxu0 %v361
    %1056 = vmatpush1.msra.mxu0 %v360
    %1057 = vmatprep.subr.mxu0 %v369
    %1058 = vmatpush1.msra.mxu0 %v368
    %1059 = vmatprep.subr.mxu0 %v377
    %1060 = vmatpush1.msra.mxu0 %v376
    %1061 = vmatprep.subr.mxu0 %v385
    %1062 = vmatpush1.msra.mxu0 %v384
    %1063 = vmatprep.subr.mxu0 %v393
    %1064 = vmatpush1.msra.mxu0 %v392
    %1065 = vmatprep.subr.mxu0 %v401
    %1066 = vmatpush1.msra.mxu0 %v400
    %1067 = vmatprep.subr.mxu0 %v409
    %1068 = vmatpush1.msra.mxu0 %v408
    %1069 = vmatprep.subr.mxu0 %v417
    %1070 = vmatpush1.msra.mxu0 %v416
    %1071 = vmatprep.subr.mxu0 %v425
    %1072 = vmatpush1.msra.mxu0 %v424
    %1073 = vmatprep.subr.mxu0 %v433
    %1074 = vmatpush1.msra.mxu0 %v432
    %1075 = vmatprep.subr.mxu0 %v441
    %1076 = vmatpush1.msra.mxu0 %v440
    %1077 = vmatprep.subr.mxu0 %v449
    %1078 = vmatpush1.msra.mxu0 %v448
    %1079 = vmatprep.subr.mxu0 %v457
    %1080 = vmatpush1.msra.mxu0 %v456
    %1081 = vmatprep.subr.mxu0 %v465
    %1082 = vmatpush1.msra.mxu0 %v464
    %1083 = vmatprep.subr.mxu0 %v473
    %1084 = vmatpush1.msra.mxu0 %v472
    %1085 = vmatprep.subr.mxu0 %v481
    %1086 = vmatpush1.msra.mxu0 %v480
    %1087 = vmatprep.subr.mxu0 %v489
    %1088 = vmatpush1.msra.mxu0 %v488
    %1089 = vmatprep.subr.mxu0 0.0
    %1090 = vmatpush1.msra.mxu0 0.0
    %1091 = vmatprep.subr.mxu0 0.0
    %1092 = vmatpush1.msra.mxu0 0.0
    %1093 = vmatprep.subr.mxu0 0.0
    %1094 = vmatpush1.msra.mxu0 0.0
    %1095 = vmatprep.subr.mxu0 0.0
    %1096 = vmatpush1.msra.mxu0 0.0
    %1097 = vmatprep.subr.mxu0 0.0
    %1098 = vmatpush1.msra.mxu0 0.0
    %1099 = vmatprep.subr.mxu0 0.0
    %1100 = vmatpush1.msra.mxu0 0.0
    %1101 = vmatprep.subr.mxu0 0.0
    %1102 = vmatpush1.msra.mxu0 0.0
    %1103 = vmatprep.subr.mxu0 0.0
    %1104 = vmatpush1.msra.mxu0 0.0
    %1105 = vmatprep.subr.mxu0 0.0
    %1106 = vmatpush1.msra.mxu0 0.0
    %1107 = vmatprep.subr.mxu0 0.0
    %1108 = vmatpush1.msra.mxu0 0.0
    %1109 = vmatprep.subr.mxu0 0.0
    %1110 = vmatpush1.msra.mxu0 0.0
    %1111 = vmatprep.subr.mxu0 0.0
    %1112 = vmatpush1.msra.mxu0 0.0
    %1113 = vmatprep.subr.mxu0 0.0
    %1114 = vmatpush1.msra.mxu0 0.0
    %1115 = vmatprep.subr.mxu0 0.0
    %1116 = vmatpush1.msra.mxu0 0.0
    %1117 = vmatprep.mubr.f32.mxu0 %v554
    %1118 = vmatmul.mubr.f32.gmra.mrb[0].mxu0 %v547
    %v1119 = vpop.f32.mrb[0].mxu0
    %v1120 = vadd.f32 %v1049, %v1119
    %v1121 = vpop.f32.mrb[0].mxu0
    %v1122 = vadd.f32 %v1051, %v1121
    %1123 = vdwg.mxu0
    %v1124 = vmax.f32 %v694, 0.0
    %v1125 = vmax.f32 %v696, 0.0
    %v1126 = vmax.f32 %v836, 0.0
    %v1127 = vmax.f32 %v838, 0.0
    %v1128 = vmax.f32 %v978, 0.0
    %v1129 = vmax.f32 %v980, 0.0
    %v1130 = vmax.f32 %v1120, 0.0
    %v1131 = vmax.f32 %v1122, 0.0
    %v1132 = vld [vmem:[#allocation7] sm:$0xff]
    %v1133 = vld [vmem:[#allocation7 + $0x8] sm:$0xff]
    %v1134 = vld [vmem:[#allocation7 + $0x10] sm:$0xff]
    %v1135 = vld [vmem:[#allocation7 + $0x18] sm:$0xff]
    %v1136 = vld [vmem:[#allocation7 + $0x20] sm:$0xff]
    %v1137 = vld [vmem:[#allocation7 + $0x28] sm:$0xff]
    %v1138 = vld [vmem:[#allocation7 + $0x30] sm:$0xff]
    %v1139 = vld [vmem:[#allocation7 + $0x38] sm:$0xff]
    %v1140 = vld [vmem:[#allocation7 + $0x40] sm:$0xff]
    %v1141 = vld [vmem:[#allocation7 + $0x48] sm:$0xff]
    %v1142 = vld [vmem:[#allocation7 + $0x50] sm:$0xff]
    %v1143 = vld [vmem:[#allocation7 + $0x58] sm:$0xff]
    %v1144 = vld [vmem:[#allocation7 + $0x60] sm:$0xff]
    %v1145 = vld [vmem:[#allocation7 + $0x68] sm:$0xff]
    %v1146 = vld [vmem:[#allocation7 + $0x70] sm:$0xff]
    %v1147 = vld [vmem:[#allocation7 + $0x78] sm:$0xff]
    %v1148 = vld [vmem:[#allocation7 + $0x80] sm:$0xff]
    %v1149 = vld [vmem:[#allocation7 + $0x88] sm:$0xff]
    %v1150 = vld [vmem:[#allocation7 + $0x90] sm:$0xff]
    %v1151 = vld [vmem:[#allocation7 + $0x98] sm:$0xff]
    %v1152 = vld [vmem:[#allocation7 + $0xa0] sm:$0xff]
    %v1153 = vld [vmem:[#allocation7 + $0xa8] sm:$0xff]
    %v1154 = vld [vmem:[#allocation7 + $0xb0] sm:$0xff]
    %v1155 = vld [vmem:[#allocation7 + $0xb8] sm:$0xff]
    %v1156 = vld [vmem:[#allocation7 + $0xc0] sm:$0xff]
    %v1157 = vld [vmem:[#allocation7 + $0xc8] sm:$0xff]
    %v1158 = vld [vmem:[#allocation7 + $0xd0] sm:$0xff]
    %v1159 = vld [vmem:[#allocation7 + $0xd8] sm:$0xff]
    %v1160 = vld [vmem:[#allocation7 + $0xe0] sm:$0xff]
    %v1161 = vld [vmem:[#allocation7 + $0xe8] sm:$0xff]
    %v1162 = vld [vmem:[#allocation7 + $0xf0] sm:$0xff]
    %v1163 = vld [vmem:[#allocation7 + $0xf8] sm:$0xff]
    %v1164 = vld [vmem:[#allocation7 + $0x100] sm:$0xff]
    %v1165 = vld [vmem:[#allocation7 + $0x108] sm:$0xff]
    %v1166 = vld [vmem:[#allocation7 + $0x110] sm:$0xff]
    %v1167 = vld [vmem:[#allocation7 + $0x118] sm:$0xff]
    %v1168 = vld [vmem:[#allocation7 + $0x120] sm:$0xff]
    %v1169 = vld [vmem:[#allocation7 + $0x128] sm:$0xff]
    %v1170 = vld [vmem:[#allocation7 + $0x130] sm:$0xff]
    %v1171 = vld [vmem:[#allocation7 + $0x138] sm:$0xff]
    %v1172 = vld [vmem:[#allocation7 + $0x140] sm:$0xff]
    %v1173 = vld [vmem:[#allocation7 + $0x148] sm:$0xff]
    %v1174 = vld [vmem:[#allocation7 + $0x150] sm:$0xff]
    %v1175 = vld [vmem:[#allocation7 + $0x158] sm:$0xff]
    %v1176 = vld [vmem:[#allocation7 + $0x160] sm:$0xff]
    %v1177 = vld [vmem:[#allocation7 + $0x168] sm:$0xff]
    %v1178 = vld [vmem:[#allocation7 + $0x170] sm:$0xff]
    %v1179 = vld [vmem:[#allocation7 + $0x178] sm:$0xff]
    %v1180 = vld [vmem:[#allocation7 + $0x180] sm:$0xff]
    %v1181 = vld [vmem:[#allocation7 + $0x188] sm:$0xff]
    %v1182 = vld [vmem:[#allocation7 + $0x190] sm:$0xff]
    %v1183 = vld [vmem:[#allocation7 + $0x198] sm:$0xff]
    %v1184 = vld [vmem:[#allocation7 + $0x1a0] sm:$0xff]
    %v1185 = vld [vmem:[#allocation7 + $0x1a8] sm:$0xff]
    %v1186 = vld [vmem:[#allocation7 + $0x1b0] sm:$0xff]
    %v1187 = vld [vmem:[#allocation7 + $0x1b8] sm:$0xff]
    %v1188 = vld [vmem:[#allocation7 + $0x1c0] sm:$0xff]
    %v1189 = vld [vmem:[#allocation7 + $0x1c8] sm:$0xff]
    %v1190 = vld [vmem:[#allocation7 + $0x1d0] sm:$0xff]
    %v1191 = vld [vmem:[#allocation7 + $0x1d8] sm:$0xff]
    %v1192 = vld [vmem:[#allocation7 + $0x1e0] sm:$0xff]
    %v1193 = vld [vmem:[#allocation7 + $0x1e8] sm:$0xff]
    %v1194 = vld [vmem:[#allocation7 + $0x1f0] sm:$0xff]
    %v1195 = vld [vmem:[#allocation7 + $0x1f8] sm:$0xff]
    %v1196 = vld [vmem:[#allocation7 + $0x200] sm:$0xff]
    %v1197 = vld [vmem:[#allocation7 + $0x208] sm:$0xff]
    %v1198 = vld [vmem:[#allocation7 + $0x210] sm:$0xff]
    %v1199 = vld [vmem:[#allocation7 + $0x218] sm:$0xff]
    %v1200 = vld [vmem:[#allocation7 + $0x220] sm:$0xff]
    %v1201 = vld [vmem:[#allocation7 + $0x228] sm:$0xff]
    %v1202 = vld [vmem:[#allocation7 + $0x230] sm:$0xff]
    %v1203 = vld [vmem:[#allocation7 + $0x238] sm:$0xff]
    %v1204 = vld [vmem:[#allocation7 + $0x240] sm:$0xff]
    %v1205 = vld [vmem:[#allocation7 + $0x248] sm:$0xff]
    %v1206 = vld [vmem:[#allocation7 + $0x250] sm:$0xff]
    %v1207 = vld [vmem:[#allocation7 + $0x258] sm:$0xff]
    %v1208 = vld [vmem:[#allocation7 + $0x260] sm:$0xff]
    %v1209 = vld [vmem:[#allocation7 + $0x268] sm:$0xff]
    %v1210 = vld [vmem:[#allocation7 + $0x270] sm:$0xff]
    %v1211 = vld [vmem:[#allocation7 + $0x278] sm:$0xff]
    %v1212 = vld [vmem:[#allocation7 + $0x280] sm:$0xff]
    %v1213 = vld [vmem:[#allocation7 + $0x288] sm:$0xff]
    %v1214 = vld [vmem:[#allocation7 + $0x290] sm:$0xff]
    %v1215 = vld [vmem:[#allocation7 + $0x298] sm:$0xff]
    %v1216 = vld [vmem:[#allocation7 + $0x2a0] sm:$0xff]
    %v1217 = vld [vmem:[#allocation7 + $0x2a8] sm:$0xff]
    %v1218 = vld [vmem:[#allocation7 + $0x2b0] sm:$0xff]
    %v1219 = vld [vmem:[#allocation7 + $0x2b8] sm:$0xff]
    %v1220 = vld [vmem:[#allocation7 + $0x2c0] sm:$0xff]
    %v1221 = vld [vmem:[#allocation7 + $0x2c8] sm:$0xff]
    %v1222 = vld [vmem:[#allocation7 + $0x2d0] sm:$0xff]
    %v1223 = vld [vmem:[#allocation7 + $0x2d8] sm:$0xff]
    %v1224 = vld [vmem:[#allocation7 + $0x2e0] sm:$0xff]
    %v1225 = vld [vmem:[#allocation7 + $0x2e8] sm:$0xff]
    %v1226 = vld [vmem:[#allocation7 + $0x2f0] sm:$0xff]
    %v1227 = vld [vmem:[#allocation7 + $0x2f8] sm:$0xff]
    %v1228 = vld [vmem:[#allocation7 + $0x300] sm:$0xff]
    %v1229 = vld [vmem:[#allocation7 + $0x308] sm:$0xff]
    %v1230 = vld [vmem:[#allocation7 + $0x310] sm:$0xff]
    %v1231 = vld [vmem:[#allocation7 + $0x318] sm:$0xff]
    %v1232 = vld [vmem:[#allocation7 + $0x320] sm:$0xff]
    %v1233 = vld [vmem:[#allocation7 + $0x328] sm:$0xff]
    %v1234 = vld [vmem:[#allocation7 + $0x330] sm:$0xff]
    %v1235 = vld [vmem:[#allocation7 + $0x338] sm:$0xff]
    %v1236 = vld [vmem:[#allocation7 + $0x340] sm:$0xff]
    %v1237 = vld [vmem:[#allocation7 + $0x348] sm:$0xff]
    %v1238 = vld [vmem:[#allocation7 + $0x350] sm:$0xff]
    %v1239 = vld [vmem:[#allocation7 + $0x358] sm:$0xff]
    %v1240 = vld [vmem:[#allocation7 + $0x360] sm:$0xff]
    %v1241 = vld [vmem:[#allocation7 + $0x368] sm:$0xff]
    %v1242 = vld [vmem:[#allocation7 + $0x370] sm:$0xff]
    %v1243 = vld [vmem:[#allocation7 + $0x378] sm:$0xff]
    %v1244 = vld [vmem:[#allocation7 + $0x380] sm:$0xff]
    %v1245 = vld [vmem:[#allocation7 + $0x388] sm:$0xff]
    %v1246 = vld [vmem:[#allocation7 + $0x390] sm:$0xff]
    %v1247 = vld [vmem:[#allocation7 + $0x398] sm:$0xff]
    %v1248 = vld [vmem:[#allocation7 + $0x3a0] sm:$0xff]
    %v1249 = vld [vmem:[#allocation7 + $0x3a8] sm:$0xff]
    %v1250 = vld [vmem:[#allocation7 + $0x3b0] sm:$0xff]
    %v1251 = vld [vmem:[#allocation7 + $0x3b8] sm:$0xff]
    %v1252 = vld [vmem:[#allocation7 + $0x3c0] sm:$0xff]
    %v1253 = vld [vmem:[#allocation7 + $0x3c8] sm:$0xff]
    %v1254 = vld [vmem:[#allocation7 + $0x3d0] sm:$0xff]
    %v1255 = vld [vmem:[#allocation7 + $0x3d8] sm:$0xff]
    %v1256 = vld [vmem:[#allocation7 + $0x3e0] sm:$0xff]
    %v1257 = vld [vmem:[#allocation7 + $0x3e8] sm:$0xff]
    %v1258 = vld [vmem:[#allocation7 + $0x3f0] sm:$0xff]
    %v1259 = vld [vmem:[#allocation7 + $0x3f8] sm:$0xff]
    %v1260 = vld [vmem:[#allocation8] sm:$0x1]
    %v1262 = vlaneseq
    %v1263 = vshrl.u32 %v1262, 7
    %v1264 = vsub.s32 0, %v1263
    %v1265 = vrot.slane %v1260, %v1264
    %1267 = vmatprep.subr.mxu0 0.0
    %1268 = vmatpush1.msra.mxu0 %v1132
    %1269 = vmatprep.subr.mxu0 0.0
    %1270 = vmatpush1.msra.mxu0 %v1133
    %1271 = vmatprep.subr.mxu0 0.0
    %1272 = vmatpush1.msra.mxu0 %v1134
    %1273 = vmatprep.subr.mxu0 0.0
    %1274 = vmatpush1.msra.mxu0 %v1135
    %1275 = vmatprep.subr.mxu0 0.0
    %1276 = vmatpush1.msra.mxu0 %v1136
    %1277 = vmatprep.subr.mxu0 0.0
    %1278 = vmatpush1.msra.mxu0 %v1137
    %1279 = vmatprep.subr.mxu0 0.0
    %1280 = vmatpush1.msra.mxu0 %v1138
    %1281 = vmatprep.subr.mxu0 0.0
    %1282 = vmatpush1.msra.mxu0 %v1139
    %1283 = vmatprep.subr.mxu0 0.0
    %1284 = vmatpush1.msra.mxu0 %v1140
    %1285 = vmatprep.subr.mxu0 0.0
    %1286 = vmatpush1.msra.mxu0 %v1141
    %1287 = vmatprep.subr.mxu0 0.0
    %1288 = vmatpush1.msra.mxu0 %v1142
    %1289 = vmatprep.subr.mxu0 0.0
    %1290 = vmatpush1.msra.mxu0 %v1143
    %1291 = vmatprep.subr.mxu0 0.0
    %1292 = vmatpush1.msra.mxu0 %v1144
    %1293 = vmatprep.subr.mxu0 0.0
    %1294 = vmatpush1.msra.mxu0 %v1145
    %1295 = vmatprep.subr.mxu0 0.0
    %1296 = vmatpush1.msra.mxu0 %v1146
    %1297 = vmatprep.subr.mxu0 0.0
    %1298 = vmatpush1.msra.mxu0 %v1147
    %1299 = vmatprep.subr.mxu0 0.0
    %1300 = vmatpush1.msra.mxu0 %v1148
    %1301 = vmatprep.subr.mxu0 0.0
    %1302 = vmatpush1.msra.mxu0 %v1149
    %1303 = vmatprep.subr.mxu0 0.0
    %1304 = vmatpush1.msra.mxu0 %v1150
    %1305 = vmatprep.subr.mxu0 0.0
    %1306 = vmatpush1.msra.mxu0 %v1151
    %1307 = vmatprep.subr.mxu0 0.0
    %1308 = vmatpush1.msra.mxu0 %v1152
    %1309 = vmatprep.subr.mxu0 0.0
    %1310 = vmatpush1.msra.mxu0 %v1153
    %1311 = vmatprep.subr.mxu0 0.0
    %1312 = vmatpush1.msra.mxu0 %v1154
    %1313 = vmatprep.subr.mxu0 0.0
    %1314 = vmatpush1.msra.mxu0 %v1155
    %1315 = vmatprep.subr.mxu0 0.0
    %1316 = vmatpush1.msra.mxu0 %v1156
    %1317 = vmatprep.subr.mxu0 0.0
    %1318 = vmatpush1.msra.mxu0 %v1157
    %1319 = vmatprep.subr.mxu0 0.0
    %1320 = vmatpush1.msra.mxu0 %v1158
    %1321 = vmatprep.subr.mxu0 0.0
    %1322 = vmatpush1.msra.mxu0 %v1159
    %1323 = vmatprep.subr.mxu0 0.0
    %1324 = vmatpush1.msra.mxu0 %v1160
    %1325 = vmatprep.subr.mxu0 0.0
    %1326 = vmatpush1.msra.mxu0 %v1161
    %1327 = vmatprep.subr.mxu0 0.0
    %1328 = vmatpush1.msra.mxu0 %v1162
    %1329 = vmatprep.subr.mxu0 0.0
    %1330 = vmatpush1.msra.mxu0 %v1163
    %1331 = vmatprep.mubr.f32.mxu0 %v1125
    %1332 = vmatmul.mubr.f32.gmra.mrb[0].mxu0 %v1124
    %v1333 = vpop.f32.mrb[0].mxu0
    %v1334 = vadd.f32 %v1265, %v1333
    %v1335 = vpop.f32.mrb[0].mxu0
    %1336 = vdwg.mxu0
    %1337 = vmatprep.subr.mxu0 0.0
    %1338 = vmatpush1.msra.mxu0 %v1164
    %1339 = vmatprep.subr.mxu0 0.0
    %1340 = vmatpush1.msra.mxu0 %v1165
    %1341 = vmatprep.subr.mxu0 0.0
    %1342 = vmatpush1.msra.mxu0 %v1166
    %1343 = vmatprep.subr.mxu0 0.0
    %1344 = vmatpush1.msra.mxu0 %v1167
    %1345 = vmatprep.subr.mxu0 0.0
    %1346 = vmatpush1.msra.mxu0 %v1168
    %1347 = vmatprep.subr.mxu0 0.0
    %1348 = vmatpush1.msra.mxu0 %v1169
    %1349 = vmatprep.subr.mxu0 0.0
    %1350 = vmatpush1.msra.mxu0 %v1170
    %1351 = vmatprep.subr.mxu0 0.0
    %1352 = vmatpush1.msra.mxu0 %v1171
    %1353 = vmatprep.subr.mxu0 0.0
    %1354 = vmatpush1.msra.mxu0 %v1172
    %1355 = vmatprep.subr.mxu0 0.0
    %1356 = vmatpush1.msra.mxu0 %v1173
    %1357 = vmatprep.subr.mxu0 0.0
    %1358 = vmatpush1.msra.mxu0 %v1174
    %1359 = vmatprep.subr.mxu0 0.0
    %1360 = vmatpush1.msra.mxu0 %v1175
    %1361 = vmatprep.subr.mxu0 0.0
    %1362 = vmatpush1.msra.mxu0 %v1176
    %1363 = vmatprep.subr.mxu0 0.0
    %1364 = vmatpush1.msra.mxu0 %v1177
    %1365 = vmatprep.subr.mxu0 0.0
    %1366 = vmatpush1.msra.mxu0 %v1178
    %1367 = vmatprep.subr.mxu0 0.0
    %1368 = vmatpush1.msra.mxu0 %v1179
    %1369 = vmatprep.subr.mxu0 0.0
    %1370 = vmatpush1.msra.mxu0 %v1180
    %1371 = vmatprep.subr.mxu0 0.0
    %1372 = vmatpush1.msra.mxu0 %v1181
    %1373 = vmatprep.subr.mxu0 0.0
    %1374 = vmatpush1.msra.mxu0 %v1182
    %1375 = vmatprep.subr.mxu0 0.0
    %1376 = vmatpush1.msra.mxu0 %v1183
    %1377 = vmatprep.subr.mxu0 0.0
    %1378 = vmatpush1.msra.mxu0 %v1184
    %1379 = vmatprep.subr.mxu0 0.0
    %1380 = vmatpush1.msra.mxu0 %v1185
    %1381 = vmatprep.subr.mxu0 0.0
    %1382 = vmatpush1.msra.mxu0 %v1186
    %1383 = vmatprep.subr.mxu0 0.0
    %1384 = vmatpush1.msra.mxu0 %v1187
    %1385 = vmatprep.subr.mxu0 0.0
    %1386 = vmatpush1.msra.mxu0 %v1188
    %1387 = vmatprep.subr.mxu0 0.0
    %1388 = vmatpush1.msra.mxu0 %v1189
    %1389 = vmatprep.subr.mxu0 0.0
    %1390 = vmatpush1.msra.mxu0 %v1190
    %1391 = vmatprep.subr.mxu0 0.0
    %1392 = vmatpush1.msra.mxu0 %v1191
    %1393 = vmatprep.subr.mxu0 0.0
    %1394 = vmatpush1.msra.mxu0 %v1192
    %1395 = vmatprep.subr.mxu0 0.0
    %1396 = vmatpush1.msra.mxu0 %v1193
    %1397 = vmatprep.subr.mxu0 0.0
    %1398 = vmatpush1.msra.mxu0 %v1194
    %1399 = vmatprep.subr.mxu0 0.0
    %1400 = vmatpush1.msra.mxu0 %v1195
    %1401 = vmatprep.mubr.f32.mxu0 %v1127
    %1402 = vmatmul.mubr.f32.gmra.mrb[0].mxu0 %v1126
    %v1403 = vpop.f32.mrb[0].mxu0
    %v1404 = vadd.f32 %v1334, %v1403
    %v1405 = vpop.f32.mrb[0].mxu0
    %1406 = vdwg.mxu0
    %1407 = vmatprep.subr.mxu0 0.0
    %1408 = vmatpush1.msra.mxu0 %v1196
    %1409 = vmatprep.subr.mxu0 0.0
    %1410 = vmatpush1.msra.mxu0 %v1197
    %1411 = vmatprep.subr.mxu0 0.0
    %1412 = vmatpush1.msra.mxu0 %v1198
    %1413 = vmatprep.subr.mxu0 0.0
    %1414 = vmatpush1.msra.mxu0 %v1199
    %1415 = vmatprep.subr.mxu0 0.0
    %1416 = vmatpush1.msra.mxu0 %v1200
    %1417 = vmatprep.subr.mxu0 0.0
    %1418 = vmatpush1.msra.mxu0 %v1201
    %1419 = vmatprep.subr.mxu0 0.0
    %1420 = vmatpush1.msra.mxu0 %v1202
    %1421 = vmatprep.subr.mxu0 0.0
    %1422 = vmatpush1.msra.mxu0 %v1203
    %1423 = vmatprep.subr.mxu0 0.0
    %1424 = vmatpush1.msra.mxu0 %v1204
    %1425 = vmatprep.subr.mxu0 0.0
    %1426 = vmatpush1.msra.mxu0 %v1205
    %1427 = vmatprep.subr.mxu0 0.0
    %1428 = vmatpush1.msra.mxu0 %v1206
    %1429 = vmatprep.subr.mxu0 0.0
    %1430 = vmatpush1.msra.mxu0 %v1207
    %1431 = vmatprep.subr.mxu0 0.0
    %1432 = vmatpush1.msra.mxu0 %v1208
    %1433 = vmatprep.subr.mxu0 0.0
    %1434 = vmatpush1.msra.mxu0 %v1209
    %1435 = vmatprep.subr.mxu0 0.0
    %1436 = vmatpush1.msra.mxu0 %v1210
    %1437 = vmatprep.subr.mxu0 0.0
    %1438 = vmatpush1.msra.mxu0 %v1211
    %1439 = vmatprep.subr.mxu0 0.0
    %1440 = vmatpush1.msra.mxu0 %v1212
    %1441 = vmatprep.subr.mxu0 0.0
    %1442 = vmatpush1.msra.mxu0 %v1213
    %1443 = vmatprep.subr.mxu0 0.0
    %1444 = vmatpush1.msra.mxu0 %v1214
    %1445 = vmatprep.subr.mxu0 0.0
    %1446 = vmatpush1.msra.mxu0 %v1215
    %1447 = vmatprep.subr.mxu0 0.0
    %1448 = vmatpush1.msra.mxu0 %v1216
    %1449 = vmatprep.subr.mxu0 0.0
    %1450 = vmatpush1.msra.mxu0 %v1217
    %1451 = vmatprep.subr.mxu0 0.0
    %1452 = vmatpush1.msra.mxu0 %v1218
    %1453 = vmatprep.subr.mxu0 0.0
    %1454 = vmatpush1.msra.mxu0 %v1219
    %1455 = vmatprep.subr.mxu0 0.0
    %1456 = vmatpush1.msra.mxu0 %v1220
    %1457 = vmatprep.subr.mxu0 0.0
    %1458 = vmatpush1.msra.mxu0 %v1221
    %1459 = vmatprep.subr.mxu0 0.0
    %1460 = vmatpush1.msra.mxu0 %v1222
    %1461 = vmatprep.subr.mxu0 0.0
    %1462 = vmatpush1.msra.mxu0 %v1223
    %1463 = vmatprep.subr.mxu0 0.0
    %1464 = vmatpush1.msra.mxu0 %v1224
    %1465 = vmatprep.subr.mxu0 0.0
    %1466 = vmatpush1.msra.mxu0 %v1225
    %1467 = vmatprep.subr.mxu0 0.0
    %1468 = vmatpush1.msra.mxu0 %v1226
    %1469 = vmatprep.subr.mxu0 0.0
    %1470 = vmatpush1.msra.mxu0 %v1227
    %1471 = vmatprep.mubr.f32.mxu0 %v1129
    %1472 = vmatmul.mubr.f32.gmra.mrb[0].mxu0 %v1128
    %v1473 = vpop.f32.mrb[0].mxu0
    %v1474 = vadd.f32 %v1404, %v1473
    %v1475 = vpop.f32.mrb[0].mxu0
    %1476 = vdwg.mxu0
    %1477 = vmatprep.subr.mxu0 0.0
    %1478 = vmatpush1.msra.mxu0 %v1228
    %1479 = vmatprep.subr.mxu0 0.0
    %1480 = vmatpush1.msra.mxu0 %v1229
    %1481 = vmatprep.subr.mxu0 0.0
    %1482 = vmatpush1.msra.mxu0 %v1230
    %1483 = vmatprep.subr.mxu0 0.0
    %1484 = vmatpush1.msra.mxu0 %v1231
    %1485 = vmatprep.subr.mxu0 0.0
    %1486 = vmatpush1.msra.mxu0 %v1232
    %1487 = vmatprep.subr.mxu0 0.0
    %1488 = vmatpush1.msra.mxu0 %v1233
    %1489 = vmatprep.subr.mxu0 0.0
    %1490 = vmatpush1.msra.mxu0 %v1234
    %1491 = vmatprep.subr.mxu0 0.0
    %1492 = vmatpush1.msra.mxu0 %v1235
    %1493 = vmatprep.subr.mxu0 0.0
    %1494 = vmatpush1.msra.mxu0 %v1236
    %1495 = vmatprep.subr.mxu0 0.0
    %1496 = vmatpush1.msra.mxu0 %v1237
    %1497 = vmatprep.subr.mxu0 0.0
    %1498 = vmatpush1.msra.mxu0 %v1238
    %1499 = vmatprep.subr.mxu0 0.0
    %1500 = vmatpush1.msra.mxu0 %v1239
    %1501 = vmatprep.subr.mxu0 0.0
    %1502 = vmatpush1.msra.mxu0 %v1240
    %1503 = vmatprep.subr.mxu0 0.0
    %1504 = vmatpush1.msra.mxu0 %v1241
    %1505 = vmatprep.subr.mxu0 0.0
    %1506 = vmatpush1.msra.mxu0 %v1242
    %1507 = vmatprep.subr.mxu0 0.0
    %1508 = vmatpush1.msra.mxu0 %v1243
    %1509 = vmatprep.subr.mxu0 0.0
    %1510 = vmatpush1.msra.mxu0 %v1244
    %1511 = vmatprep.subr.mxu0 0.0
    %1512 = vmatpush1.msra.mxu0 %v1245
    %1513 = vmatprep.subr.mxu0 0.0
    %1514 = vmatpush1.msra.mxu0 %v1246
    %1515 = vmatprep.subr.mxu0 0.0
    %1516 = vmatpush1.msra.mxu0 %v1247
    %1517 = vmatprep.subr.mxu0 0.0
    %1518 = vmatpush1.msra.mxu0 %v1248
    %1519 = vmatprep.subr.mxu0 0.0
    %1520 = vmatpush1.msra.mxu0 %v1249
    %1521 = vmatprep.subr.mxu0 0.0
    %1522 = vmatpush1.msra.mxu0 %v1250
    %1523 = vmatprep.subr.mxu0 0.0
    %1524 = vmatpush1.msra.mxu0 %v1251
    %1525 = vmatprep.subr.mxu0 0.0
    %1526 = vmatpush1.msra.mxu0 %v1252
    %1527 = vmatprep.subr.mxu0 0.0
    %1528 = vmatpush1.msra.mxu0 %v1253
    %1529 = vmatprep.subr.mxu0 0.0
    %1530 = vmatpush1.msra.mxu0 %v1254
    %1531 = vmatprep.subr.mxu0 0.0
    %1532 = vmatpush1.msra.mxu0 %v1255
    %1533 = vmatprep.subr.mxu0 0.0
    %1534 = vmatpush1.msra.mxu0 %v1256
    %1535 = vmatprep.subr.mxu0 0.0
    %1536 = vmatpush1.msra.mxu0 %v1257
    %1537 = vmatprep.subr.mxu0 0.0
    %1538 = vmatpush1.msra.mxu0 %v1258
    %1539 = vmatprep.subr.mxu0 0.0
    %1540 = vmatpush1.msra.mxu0 %v1259
    %1541 = vmatprep.mubr.f32.mxu0 %v1131
    %1542 = vmatmul.mubr.f32.gmra.mrb[0].mxu0 %v1130
    %v1543 = vpop.f32.mrb[0].mxu0
    %v1544 = vadd.f32 %v1474, %v1543
    %v1545 = vpop.f32.mrb[0].mxu0
    %1546 = vdwg.mxu0
    %v1547 = vmax.f32 %v1544, 0.0
    %v1548 = vld [vmem:[%s5] sm:$0xff]
    %v1549 = vld [vmem:[%s5 + $0x8] sm:$0xff]
    %v1550 = vld [vmem:[%s5 + $0x10] sm:$0xff]
    %v1551 = vld [vmem:[%s5 + $0x18] sm:$0xff]
    %v1552 = vld [vmem:[%s5 + $0x20] sm:$0xff]
    %v1553 = vld [vmem:[%s5 + $0x28] sm:$0xff]
    %v1554 = vld [vmem:[%s5 + $0x30] sm:$0xff]
    %v1555 = vld [vmem:[%s5 + $0x38] sm:$0xff]
    %v1556 = vld [vmem:[%s5 + $0x40] sm:$0xff]
    %v1557 = vld [vmem:[%s5 + $0x48] sm:$0xff]
    %v1558 = vld [vmem:[%s5 + $0x50] sm:$0xff]
    %v1559 = vld [vmem:[%s5 + $0x58] sm:$0xff]
    %v1560 = vld [vmem:[%s5 + $0x60] sm:$0xff]
    %v1561 = vld [vmem:[%s5 + $0x68] sm:$0xff]
    %v1562 = vld [vmem:[%s5 + $0x70] sm:$0xff]
    %v1563 = vld [vmem:[%s5 + $0x78] sm:$0xff]
    %v1564 = vld [vmem:[#allocation10] sm:$0x1]
    %v1566 = vlaneseq
    %v1567 = vshrl.u32 %v1566, 7
    %v1568 = vsub.s32 0, %v1567
    %v1569 = vrot.slane %v1564, %v1568
    %1571 = vmatprep.subr.mxu0 0.0
    %1572 = vmatpush1.msra.mxu0 %v1548
    %1573 = vmatprep.subr.mxu0 0.0
    %1574 = vmatpush1.msra.mxu0 %v1549
    %1575 = vmatprep.subr.mxu0 0.0
    %1576 = vmatpush1.msra.mxu0 %v1550
    %1577 = vmatprep.subr.mxu0 0.0
    %1578 = vmatpush1.msra.mxu0 %v1551
    %1579 = vmatprep.subr.mxu0 0.0
    %1580 = vmatpush1.msra.mxu0 %v1552
    %1581 = vmatprep.subr.mxu0 0.0
    %1582 = vmatpush1.msra.mxu0 %v1553
    %1583 = vmatprep.subr.mxu0 0.0
    %1584 = vmatpush1.msra.mxu0 %v1554
    %1585 = vmatprep.subr.mxu0 0.0
    %1586 = vmatpush1.msra.mxu0 %v1555
    %1587 = vmatprep.subr.mxu0 0.0
    %1588 = vmatpush1.msra.mxu0 %v1556
    %1589 = vmatprep.subr.mxu0 0.0
    %1590 = vmatpush1.msra.mxu0 %v1557
    %1591 = vmatprep.subr.mxu0 0.0
    %1592 = vmatpush1.msra.mxu0 %v1558
    %1593 = vmatprep.subr.mxu0 0.0
    %1594 = vmatpush1.msra.mxu0 %v1559
    %1595 = vmatprep.subr.mxu0 0.0
    %1596 = vmatpush1.msra.mxu0 %v1560
    %1597 = vmatprep.subr.mxu0 0.0
    %1598 = vmatpush1.msra.mxu0 %v1561
    %1599 = vmatprep.subr.mxu0 0.0
    %1600 = vmatpush1.msra.mxu0 %v1562
    %1601 = vmatprep.subr.mxu0 0.0
    %1602 = vmatpush1.msra.mxu0 %v1563
    %1603 = vmatprep.subr.mxu0 0.0
    %1604 = vmatpush1.msra.mxu0 0.0
    %1605 = vmatprep.subr.mxu0 0.0
    %1606 = vmatpush1.msra.mxu0 0.0
    %1607 = vmatprep.subr.mxu0 0.0
    %1608 = vmatpush1.msra.mxu0 0.0
    %1609 = vmatprep.subr.mxu0 0.0
    %1610 = vmatpush1.msra.mxu0 0.0
    %1611 = vmatprep.subr.mxu0 0.0
    %1612 = vmatpush1.msra.mxu0 0.0
    %1613 = vmatprep.subr.mxu0 0.0
    %1614 = vmatpush1.msra.mxu0 0.0
    %1615 = vmatprep.subr.mxu0 0.0
    %1616 = vmatpush1.msra.mxu0 0.0
    %1617 = vmatprep.subr.mxu0 0.0
    %1618 = vmatpush1.msra.mxu0 0.0
    %1619 = vmatprep.subr.mxu0 0.0
    %1620 = vmatpush1.msra.mxu0 0.0
    %1621 = vmatprep.subr.mxu0 0.0
    %1622 = vmatpush1.msra.mxu0 0.0
    %1623 = vmatprep.subr.mxu0 0.0
    %1624 = vmatpush1.msra.mxu0 0.0
    %1625 = vmatprep.subr.mxu0 0.0
    %1626 = vmatpush1.msra.mxu0 0.0
    %1627 = vmatprep.subr.mxu0 0.0
    %1628 = vmatpush1.msra.mxu0 0.0
    %1629 = vmatprep.subr.mxu0 0.0
    %1630 = vmatpush1.msra.mxu0 0.0
    %1631 = vmatprep.subr.mxu0 0.0
    %1632 = vmatpush1.msra.mxu0 0.0
    %1633 = vmatprep.subr.mxu0 0.0
    %1634 = vmatpush1.msra.mxu0 0.0
    %1635 = vmatprep.mubr.f32.mxu0 0.0
    %1636 = vmatmul.mubr.f32.gmra.mrb[0].mxu0 %v1547
    %v1637 = vpop.f32.mrb[0].mxu0
    %v1638 = vadd.f32 %v1569, %v1637
    %v1639 = vpop.f32.mrb[0].mxu0
    %1640 = vdwg.mxu0
    %vm1641 = vcmask 41984
    %1642 = vst.msk [vmem:[#allocation11] sm:$0x3] %vm1641, %v1638
    // Predicated region
    $region50: #{actor_forward.1} parent=1 // pred_check
      _
    $region51: #{actor_forward.1} parent=1 // pred_check_branch
      %1644 = sbr.rel (0) target = $region53
    $region52: #{actor_forward.1} parent=1 // pred_region
      %s1646 = ssub.s32 32, 32
      %1647 = vsyncadd [#allocation4], %s1646
      %s1649 = sshll.u32 [#allocation11], 4
      %s1650 = int_to_ptr.vmem [resolvable:$true] %s1649
      %1652 = dma.vmem_to_hbm [thread:$0]  %s1650, 32, %s7, [#allocation4]
    $region53: #{actor_forward.1} parent=1 // pred_fallthru
      _
    // Predicated region
    $region54: #{actor_forward.1} parent=1 // pred_check
      _
    $region55: #{actor_forward.1} parent=1 // pred_check_branch
      %1654 = sbr.rel (0) target = $region57
    $region56: #{actor_forward.1} parent=1 // pred_region
      %1655 = dma.done [#allocation4], 32
    $region57: #{actor_forward.1} parent=1 // pred_fallthru
      _
    %1656 = vsyncpa [#allocation3], 1
    %1657 = vsyncpa [#allocation6], 1
    %1658 = vsyncpa [#allocation9], 1
    %1659 = vsyncpa [#allocation4], 1

</llo_original>
